<compile_context>
chip_gen: v6e
topology: v6e:2x2x1
jax: 0.10.0
libtpu: 0.0.40
codegen_flags: <defaults>
</compile_context>

<pallas_src>
import functools

import numpy as np
import jax
import jax.numpy as jnp
from jax.experimental import pallas as pl
from jax.experimental.pallas import tpu as pltpu  # noqa: F401  (TPU backend)

LOG2 = float(np.log(2.0))
LANE = 128   # TPU lane width: feature axes padded to this
ROW = 16     # atom/edge row padding: bf16 sublane-pack granularity (NOT 128)
SUB = 8      # sublane granularity: molecule/output row padding


def _round_up(x, m):
    return ((x + m - 1) // m) * m


def _ssp(x):
    # shifted softplus: softplus(x) - log(2), numerically stable form; _ssp(0) == 0
    return jnp.maximum(x, 0.0) + jnp.log1p(jnp.exp(-jnp.abs(x))) - LOG2


def _pad2(w, rows, cols):
    w = jnp.asarray(w, jnp.float32)
    return jnp.pad(w, ((0, rows - w.shape[0]), (0, cols - w.shape[1])))


# ----------------------------- fused Pallas kernel -----------------------------

def _schnet_fused_kernel(r0_ref, dbc_ref, aggr_ref, gath_ref, scat_ref, mol_ref,
                         ew1c_ref, eb1c_ref, b_ref, w_ref, energy_ref,
                         *, coeff, n_conv):
    f32, bf16 = jnp.float32, jnp.bfloat16

    r = r0_ref[...]            # [Np,128] f32 node features
    aggr = aggr_ref[...]       # [Np,128] f32 lane-broadcast TI weight
    gath = gath_ref[...]       # [2Ep,Np] bf16 one-hot gather  (src | dst stacked on rows)
    scat = scat_ref[...]       # [Np,2Ep] bf16 one-hot scatter (dst | src stacked on lanes)
    biases = b_ref[...]        # [4C+3,128] f32 packed biases (+ gaussian offsets row 0)

    # Gaussian smearing of edge distances (conv independent; EUP work).
    g = jnp.exp(coeff * (dbc_ref[...] - biases[0:1, :]) ** 2)                 # [Ep,128]

    # First edge-filter Dense of ALL convolutions in one wide MXU pass.
    h_all = _ssp(jnp.dot(g.astype(bf16), ew1c_ref[...],
                         preferred_element_type=f32) + eb1c_ref[...])         # [Ep,C*128]

    # TODO(synk): switch to lax.fori_loop with dynamic w_ref[c] indexing if n_conv
    # grows beyond ~3 (static unroll does not bound vreg live ranges).
    for c in range(n_conv):
        bb, wb = 1 + 4 * c, 4 * c
        eb2 = biases[bb + 0:bb + 1, :]
        nb = biases[bb + 1:bb + 2, :]
        ub1 = biases[bb + 2:bb + 3, :]
        ub2 = biases[bb + 3:bb + 4, :]

        # second edge-filter Dense
        h = h_all[:, c * LANE:(c + 1) * LANE]
        w_e = jnp.dot(h.astype(bf16), w_ref[wb + 0], preferred_element_type=f32) + eb2

        # node filter * thermodynamic-integration weight
        rf = (jnp.dot(r.astype(bf16), w_ref[wb + 1], preferred_element_type=f32) + nb) * aggr

        # gather BOTH edge endpoints with ONE one-hot matmul:
        #   rows [0:Ep] -> rf[a[:,0]], rows [Ep:2Ep] -> rf[a[:,1]]
        # (bf16 MXU gather: values truncated to bf16, within the dense layers' precision)
        rf_both = jnp.dot(gath, rf.astype(bf16), preferred_element_type=f32)   # [2Ep,128]
        msg = rf_both * jnp.concatenate([w_e, w_e], axis=0)

        # scatter-add BOTH message directions onto atoms with ONE matmul
        agg = jnp.dot(scat, msg.astype(bf16), preferred_element_type=f32)      # [Np,128]

        # update network + residual
        hu = _ssp(jnp.dot(agg.astype(bf16), w_ref[wb + 2], preferred_element_type=f32) + ub1)
        r = r + jnp.dot(hu.astype(bf16), w_ref[wb + 3], preferred_element_type=f32) + ub2

    # atomwise readout: Dense -> shifted softplus -> Dense (only lane 0 is real)
    rb1 = biases[1 + 4 * n_conv:2 + 4 * n_conv, :]
    rb2 = biases[2 + 4 * n_conv:3 + 4 * n_conv, :]
    hr = _ssp(jnp.dot(r.astype(bf16), w_ref[4 * n_conv + 0], preferred_element_type=f32) + rb1)
    ae = jnp.dot(hr.astype(bf16), w_ref[4 * n_conv + 1], preferred_element_type=f32) + rb2

    # per-molecule energy: one-hot molecule matmul (zero columns mask padded atoms)
    energy_ref[...] = jnp.dot(mol_ref[...], ae.astype(bf16), preferred_element_type=f32)


# ----------------------------- one-time packing (hoisted) -----------------------------

def init_params(key, n_atom_basis, n_filters, n_gaussians, n_convolutions, cutoff):
    def dense(k, din, dout):
        kw, kb = jax.random.split(k)
        w = (jax.random.normal(kw, (din, dout), jnp.float32) / np.sqrt(din)).astype(jnp.float32)
        b = (jax.random.normal(kb, (1, dout), jnp.float32) * 0.01).astype(jnp.float32)
        return w, b

    keys = jax.random.split(key, n_convolutions + 2)

    # nn.Embedding(100, n_atom_basis, padding_idx=0): row 0 zeroed
    embed = jax.random.normal(keys[0], (100, n_atom_basis), jnp.float32) * 0.1
    embed = embed.at[0].set(0.0)

    g_off = jnp.linspace(0.0, cutoff, n_gaussians).reshape(1, n_gaussians).astype(jnp.float32)
    width = cutoff / (n_gaussians - 1)
    g_coeff = -0.5 / (width ** 2)

    convs = []
    for c in range(n_convolutions):
        ks = jax.random.split(keys[1 + c], 5)
        ew1, eb1 = dense(ks[0], n_gaussians, n_gaussians)
        ew2, eb2 = dense(ks[1], n_gaussians, n_filters)
        nw, nb = dense(ks[2], n_atom_basis, n_filters)
        uw1, ub1 = dense(ks[3], n_filters, n_atom_basis)
        uw2, ub2 = dense(ks[4], n_atom_basis, n_atom_basis)
        convs.append(dict(ew1=ew1, eb1=eb1, ew2=ew2, eb2=eb2,
                          nw=nw, nb=nb, uw1=uw1, ub1=ub1, uw2=uw2, ub2=ub2))

    kr1, kr2 = jax.random.split(keys[-1])
    rw1, rb1 = dense(kr1, n_atom_basis, n_atom_basis // 2)
    rw2, rb2 = dense(kr2, n_atom_basis // 2, 1)

    return dict(embed=embed, g_off=g_off, g_coeff=g_coeff, convs=convs,
                rw1=rw1, rb1=rb1, rw2=rw2, rb2=rb2)


def pack_params(params):
    """One-time packing of weights into padded / stacked / bf16 arrays."""
    cs = params['convs']
    C = len(cs)
    ew1_cat = jnp.concatenate([_pad2(cv['ew1'], LANE, LANE) for cv in cs], axis=1)  # [128,C*128]
    eb1_cat = jnp.concatenate([_pad2(cv['eb1'], 1, LANE) for cv in cs], axis=1)     # [1,  C*128]
    b_rows, w_mats = [_pad2(params['g_off'], 1, LANE)], []
    for cv in cs:
        b_rows += [_pad2(cv['eb2'], 1, LANE), _pad2(cv['nb'], 1, LANE),
                   _pad2(cv['ub1'], 1, LANE), _pad2(cv['ub2'], 1, LANE)]
        w_mats += [_pad2(cv['ew2'], LANE, LANE), _pad2(cv['nw'], LANE, LANE),
                   _pad2(cv['uw1'], LANE, LANE), _pad2(cv['uw2'], LANE, LANE)]
    b_rows += [_pad2(params['rb1'], 1, LANE), _pad2(params['rb2'], 1, LANE)]
    w_mats += [_pad2(params['rw1'], LANE, LANE), _pad2(params['rw2'], LANE, LANE)]
    return dict(
        embed=params['embed'],
        g_coeff=float(params['g_coeff']),
        n_conv=C,
        ew1_cat=ew1_cat.astype(jnp.bfloat16),            # [128, C*128]
        eb1_cat=eb1_cat,                                 # [1,   C*128]  f32
        b_stack=jnp.concatenate(b_rows, axis=0),         # [4C+3, 128]   f32
        w_stack=jnp.stack(w_mats).astype(jnp.bfloat16),  # [4C+2, 128, 128]
    )


def pack_graph(nbr_list, mol_idx, n_atoms, n_mol):
    """One-time per-graph packing: one-hot gather / scatter / molecule matrices (bf16,
    0/1 exact) depend only on connectivity and are reused across forward calls."""
    n_edges = int(nbr_list.shape[0])
    n_pad = _round_up(max(int(n_atoms), 1), ROW)
    e_pad = _round_up(max(n_edges, 1), ROW)
    m_pad = _round_up(max(int(n_mol), 1), SUB)

    src = jax.nn.one_hot(nbr_list[:, 0], n_pad, dtype=jnp.float32)            # [E, Np]
    dst = jax.nn.one_hot(nbr_list[:, 1], n_pad, dtype=jnp.float32)
    pad_e = lambda x: jnp.pad(x, ((0, e_pad - n_edges), (0, 0)))
    gath_both = jnp.concatenate([pad_e(src), pad_e(dst)], axis=0)             # [2Ep, Np]
    scat_both = jnp.concatenate([pad_e(dst), pad_e(src)], axis=0).T           # [Np, 2Ep]
    mol = jax.nn.one_hot(mol_idx, n_mol, dtype=jnp.float32).T                 # [M,  N ]
    mol_oh = jnp.pad(mol, ((0, m_pad - n_mol), (0, n_pad - n_atoms)))         # [Mp, Np]

    return dict(
        nbr_list=jnp.asarray(nbr_list, jnp.int32),
        gath=gath_both.astype(jnp.bfloat16),
        scat=scat_both.astype(jnp.bfloat16),
        mol=mol_oh.astype(jnp.bfloat16),
        n_pad=n_pad, e_pad=e_pad, m_pad=m_pad,
        n_atoms=int(n_atoms), n_edges=n_edges, n_mol=int(n_mol),
    )


# ----------------------------- forward pass -----------------------------

def graph_conv_integration_forward(packed, graph, nxyz, aggr_wgt):
    """GraphConvIntegration forward (SchNet + aggr_wgt), fully fused in one Pallas call."""
    z = nxyz[:, 0].astype(jnp.int32)
    xyz = nxyz[:, 1:4]
    nbr = graph['nbr_list']
    n_atoms, n_edges = graph['n_atoms'], graph['n_edges']
    n_pad, e_pad, m_pad = graph['n_pad'], graph['e_pad'], graph['m_pad']
    A = packed['embed'].shape[1]

    # edge distances: ||xyz[i] - xyz[j]||   (PBC offsets = 0 here)
    diff = xyz[nbr[:, 0]] - xyz[nbr[:, 1]]
    d = jnp.sqrt(jnp.sum(diff * diff, axis=1))                                 # [E]
    # TODO(synk): forces (-dE/dxyz) need a custom_vjp backward kernel; guard zero-length
    # edges (sqrt(0) -> NaN grad) with a safe norm when that is added.

    # lane-broadcast inputs (avoid degenerate (rows,1) DMAs / masked partial stores)
    d_bc = jnp.broadcast_to(jnp.pad(d, (0, e_pad - n_edges))[:, None], (e_pad, LANE))
    aggr_bc = jnp.broadcast_to(
        jnp.pad(aggr_wgt.reshape(-1).astype(jnp.float32), (0, n_pad - n_atoms))[:, None],
        (n_pad, LANE))
    r0 = jnp.pad(packed['embed'][z].astype(jnp.float32),
                 ((0, n_pad - n_atoms), (0, LANE - A)))

    kernel = functools.partial(_schnet_fused_kernel,
                               coeff=packed['g_coeff'], n_conv=packed['n_conv'])
    # Single gridless invocation: the whole padded problem (<1 MiB) lives in VMEM.
    energy_pad = pl.pallas_call(
        kernel,
        out_shape=jax.ShapeDtypeStruct((m_pad, LANE), jnp.float32),
    )(r0, d_bc, aggr_bc, graph['gath'], graph['scat'], graph['mol'],
      packed['ew1_cat'], packed['eb1_cat'], packed['b_stack'], packed['w_stack'])

    return {'energy': energy_pad[:graph['n_mol'], 0]}


# ----------------------------- plain-JAX reference -----------------------------

def _reference_forward(params, nxyz, nbr_list, aggr_wgt, mol_idx, n_mol):
    z = nxyz[:, 0].astype(jnp.int32)
    xyz = nxyz[:, 1:4]
    n_atoms = nxyz.shape[0]
    diff = xyz[nbr_list[:, 0]] - xyz[nbr_list[:, 1]]
    d = jnp.sqrt(jnp.sum(diff * diff, axis=1))
    r = params['embed'][z]
    g = jnp.exp(params['g_coeff'] * (d[:, None] - params['g_off']) ** 2)
    for cv in params['convs']:
        w_e = _ssp(g @ cv['ew1'] + cv['eb1']) @ cv['ew2'] + cv['eb2']
        rf = (r @ cv['nw'] + cv['nb']) * aggr_wgt
        rij = rf[nbr_list[:, 0]] * w_e
        rji = rf[nbr_list[:, 1]] * w_e
        agg = jax.ops.segment_sum(rij, nbr_list[:, 1], num_segments=n_atoms) \
            + jax.ops.segment_sum(rji, nbr_list[:, 0], num_segments=n_atoms)
        r = r + _ssp(agg @ cv['uw1'] + cv['ub1']) @ cv['uw2'] + cv['ub2']
    ae = _ssp(r @ params['rw1'] + params['rb1']) @ params['rw2'] + params['rb2']
    return jax.ops.segment_sum(ae[:, 0], mol_idx, num_segments=n_mol)


if __name__ == "__main__":
    key = jax.random.PRNGKey(0)

    # model hyperparameters (small, consistent with SchNet defaults)
    n_atom_basis = 32
    n_filters = 32
    n_gaussians = 32
    n_convolutions = 2
    cutoff = 5.0

    # synthetic batch: 2 molecules x 8 atoms
    n_mol = 2
    atoms_per_mol = 8
    n_atoms = n_mol * atoms_per_mol

    k_z, k_xyz, k_w, k_par = jax.random.split(key, 4)
    z = jax.random.randint(k_z, (n_atoms,), 1, 10).astype(jnp.float32)
    xyz = jax.random.uniform(k_xyz, (n_atoms, 3), jnp.float32, minval=0.0, maxval=3.0)
    nxyz = jnp.concatenate([z[:, None], xyz], axis=1)                 # [n_atoms, 4]

    # undirected (i < j) neighbor list within each molecule (each undirected edge is
    # scattered in both directions inside the convolution, matching the NFF convention)
    nbr = []
    for m in range(n_mol):
        base = m * atoms_per_mol
        for i in range(atoms_per_mol):
            for j in range(i + 1, atoms_per_mol):
                nbr.append((base + i, base + j))
    nbr_list = jnp.array(nbr, dtype=jnp.int32)                        # [56, 2]

    aggr_wgt = jax.random.uniform(k_w, (n_atoms, 1), jnp.float32)     # per-atom TI weight
    mol_idx = jnp.repeat(jnp.arange(n_mol, dtype=jnp.int32), atoms_per_mol)

    params = init_params(k_par, n_atom_basis, n_filters, n_gaussians, n_convolutions, cutoff)

    # one-time packing (hoisted out of the per-call path)
    packed = pack_params(params)
    graph = pack_graph(nbr_list, mol_idx, n_atoms, n_mol)

    fwd = jax.jit(lambda nxyz_, w_: graph_conv_integration_forward(packed, graph, nxyz_, w_))
    results = fwd(nxyz, aggr_wgt)
    energy = jax.block_until_ready(results['energy'])
    assert energy.shape == (n_mol,)
    assert bool(jnp.all(jnp.isfinite(energy)))

    # sanity check against a plain-JAX reference (loose tol: MXU bf16 matmul precision)
    ref = jax.block_until_ready(
        _reference_forward(params, nxyz, nbr_list, aggr_wgt, mol_idx, n_mol))
    err = float(jnp.max(jnp.abs(energy - ref)))
    scale = float(jnp.max(jnp.abs(ref)))
    assert err <= 5e-2 * scale + 5e-3, f"kernel/reference mismatch: err={err}, ref scale={scale}"

    print("KERNEL_OK")
</pallas_src>

<mosaic_0001>
module attributes {stable_mosaic.version = 11 : i64} {
  func.func @_schnet_fused_kernel(%arg0: memref<16x128xf32, #tpu.memory_space<vmem>>, %arg1: memref<64x128xf32, #tpu.memory_space<vmem>>, %arg2: memref<16x128xf32, #tpu.memory_space<vmem>>, %arg3: memref<128x16xbf16, #tpu.memory_space<vmem>>, %arg4: memref<16x128xbf16, #tpu.memory_space<vmem>>, %arg5: memref<8x16xbf16, #tpu.memory_space<vmem>>, %arg6: memref<128x256xbf16, #tpu.memory_space<vmem>>, %arg7: memref<1x256xf32, #tpu.memory_space<vmem>>, %arg8: memref<11x128xf32, #tpu.memory_space<vmem>>, %arg9: memref<10x128x128xbf16, #tpu.memory_space<vmem>>, %arg10: memref<8x128xf32, #tpu.memory_space<vmem>>) attributes {dimension_semantics = [], scalar_prefetch = 0 : i64, scratch_operands = 0 : i64, tpu.core_type = #tpu.core_type<tc>} {
    %c0 = arith.constant 0 : index
    %c0_0 = arith.constant 0 : index
    %0 = vector.load %arg0[%c0, %c0_0] : memref<16x128xf32, #tpu.memory_space<vmem>>, vector<16x128xf32>
    %c0_1 = arith.constant 0 : index
    %c0_2 = arith.constant 0 : index
    %1 = vector.load %arg2[%c0_1, %c0_2] : memref<16x128xf32, #tpu.memory_space<vmem>>, vector<16x128xf32>
    %c0_3 = arith.constant 0 : index
    %c0_4 = arith.constant 0 : index
    %2 = vector.load %arg3[%c0_3, %c0_4] : memref<128x16xbf16, #tpu.memory_space<vmem>>, vector<128x16xbf16>
    %c0_5 = arith.constant 0 : index
    %c0_6 = arith.constant 0 : index
    %3 = vector.load %arg4[%c0_5, %c0_6] : memref<16x128xbf16, #tpu.memory_space<vmem>>, vector<16x128xbf16>
    %c0_7 = arith.constant 0 : index
    %c0_8 = arith.constant 0 : index
    %4 = vector.load %arg8[%c0_7, %c0_8] : memref<11x128xf32, #tpu.memory_space<vmem>>, vector<11x128xf32>
    %c0_9 = arith.constant 0 : index
    %c0_10 = arith.constant 0 : index
    %5 = vector.load %arg1[%c0_9, %c0_10] : memref<64x128xf32, #tpu.memory_space<vmem>>, vector<64x128xf32>
    %6 = vector.extract_strided_slice %4 {offsets = [0, 0], sizes = [1, 128], strides = [1, 1]} : vector<11x128xf32> to vector<1x128xf32>
    %7 = vector.broadcast %6 : vector<1x128xf32> to vector<64x128xf32>
    %8 = arith.subf %5, %7 : vector<64x128xf32>
    %9 = arith.mulf %8, %8 : vector<64x128xf32>
    %cst = arith.constant -1.922000e+01 : f32
    %10 = vector.broadcast %cst : f32 to vector<64x128xf32>
    %11 = arith.mulf %10, %9 : vector<64x128xf32>
    %12 = math.exp %11 : vector<64x128xf32>
    %13 = arith.truncf %12 : vector<64x128xf32> to vector<64x128xbf16>
    %c0_11 = arith.constant 0 : index
    %c0_12 = arith.constant 0 : index
    %14 = vector.load %arg6[%c0_11, %c0_12] : memref<128x256xbf16, #tpu.memory_space<vmem>>, vector<128x256xbf16>
    %cst_13 = arith.constant dense<0.000000e+00> : vector<64x256xf32>
    %15 = tpu.matmul %13, %14, %cst_13 {dimension_numbers = #tpu.dot_dimension_numbers<[1], [0], [0], [1], [0, 0, 1, 1], [], []>} : vector<64x128xbf16>, vector<128x256xbf16>, vector<64x256xf32> -> vector<64x256xf32>
    %c0_14 = arith.constant 0 : index
    %c0_15 = arith.constant 0 : index
    %16 = vector.load %arg7[%c0_14, %c0_15] : memref<1x256xf32, #tpu.memory_space<vmem>>, vector<1x256xf32>
    %17 = vector.broadcast %16 : vector<1x256xf32> to vector<64x256xf32>
    %18 = arith.addf %15, %17 : vector<64x256xf32>
    %cst_16 = arith.constant 0.000000e+00 : f32
    %19 = vector.broadcast %cst_16 : f32 to vector<64x256xf32>
    %20 = arith.maximumf %18, %19 : vector<64x256xf32>
    %21 = math.absf %18 : vector<64x256xf32>
    %cst_17 = arith.constant 0.000000e+00 : f32
    %22 = vector.broadcast %cst_17 : f32 to vector<64x256xf32>
    %23 = arith.subf %22, %21 : vector<64x256xf32>
    %24 = math.exp %23 : vector<64x256xf32>
    %25 = math.log1p %24 : vector<64x256xf32>
    %26 = arith.addf %20, %25 : vector<64x256xf32>
    %cst_18 = arith.constant 0.693147182 : f32
    %27 = vector.broadcast %cst_18 : f32 to vector<64x256xf32>
    %28 = arith.subf %26, %27 : vector<64x256xf32>
    %29 = vector.extract_strided_slice %4 {offsets = [1, 0], sizes = [1, 128], strides = [1, 1]} : vector<11x128xf32> to vector<1x128xf32>
    %30 = vector.extract_strided_slice %4 {offsets = [2, 0], sizes = [1, 128], strides = [1, 1]} : vector<11x128xf32> to vector<1x128xf32>
    %31 = vector.extract_strided_slice %4 {offsets = [3, 0], sizes = [1, 128], strides = [1, 1]} : vector<11x128xf32> to vector<1x128xf32>
    %32 = vector.extract_strided_slice %4 {offsets = [4, 0], sizes = [1, 128], strides = [1, 1]} : vector<11x128xf32> to vector<1x128xf32>
    %33 = vector.extract_strided_slice %28 {offsets = [0, 0], sizes = [64, 128], strides = [1, 1]} : vector<64x256xf32> to vector<64x128xf32>
    %34 = arith.truncf %33 : vector<64x128xf32> to vector<64x128xbf16>
    %c0_19 = arith.constant 0 : index
    %c0_20 = arith.constant 0 : index
    %c0_21 = arith.constant 0 : index
    %35 = vector.load %arg9[%c0_19, %c0_20, %c0_21] : memref<10x128x128xbf16, #tpu.memory_space<vmem>>, vector<1x128x128xbf16>
    %36 = vector.shape_cast %35 : vector<1x128x128xbf16> to vector<128x128xbf16>
    %cst_22 = arith.constant dense<0.000000e+00> : vector<64x128xf32>
    %37 = tpu.matmul %34, %36, %cst_22 {dimension_numbers = #tpu.dot_dimension_numbers<[1], [0], [0], [1], [0, 0, 1, 1], [], []>} : vector<64x128xbf16>, vector<128x128xbf16>, vector<64x128xf32> -> vector<64x128xf32>
    %38 = vector.broadcast %29 : vector<1x128xf32> to vector<64x128xf32>
    %39 = arith.addf %37, %38 : vector<64x128xf32>
    %40 = arith.truncf %0 : vector<16x128xf32> to vector<16x128xbf16>
    %c1 = arith.constant 1 : index
    %c0_23 = arith.constant 0 : index
    %c0_24 = arith.constant 0 : index
    %41 = vector.load %arg9[%c1, %c0_23, %c0_24] : memref<10x128x128xbf16, #tpu.memory_space<vmem>>, vector<1x128x128xbf16>
    %42 = vector.shape_cast %41 : vector<1x128x128xbf16> to vector<128x128xbf16>
    %cst_25 = arith.constant dense<0.000000e+00> : vector<16x128xf32>
    %43 = tpu.matmul %40, %42, %cst_25 {dimension_numbers = #tpu.dot_dimension_numbers<[1], [0], [0], [1], [0, 0, 1, 1], [], []>} : vector<16x128xbf16>, vector<128x128xbf16>, vector<16x128xf32> -> vector<16x128xf32>
    %44 = vector.broadcast %30 : vector<1x128xf32> to vector<16x128xf32>
    %45 = arith.addf %43, %44 : vector<16x128xf32>
    %46 = arith.mulf %45, %1 : vector<16x128xf32>
    %47 = arith.truncf %46 : vector<16x128xf32> to vector<16x128xbf16>
    %cst_26 = arith.constant dense<0.000000e+00> : vector<128x128xf32>
    %48 = tpu.matmul %2, %47, %cst_26 {dimension_numbers = #tpu.dot_dimension_numbers<[1], [0], [0], [1], [0, 0, 1, 1], [], []>} : vector<128x16xbf16>, vector<16x128xbf16>, vector<128x128xf32> -> vector<128x128xf32>
    %49 = tpu.concatenate %39, %39 in 0 : vector<64x128xf32>, vector<64x128xf32> -> vector<128x128xf32>
    %50 = arith.mulf %48, %49 : vector<128x128xf32>
    %51 = arith.truncf %50 : vector<128x128xf32> to vector<128x128xbf16>
    %cst_27 = arith.constant dense<0.000000e+00> : vector<16x128xf32>
    %52 = tpu.matmul %3, %51, %cst_27 {dimension_numbers = #tpu.dot_dimension_numbers<[1], [0], [0], [1], [0, 0, 1, 1], [], []>} : vector<16x128xbf16>, vector<128x128xbf16>, vector<16x128xf32> -> vector<16x128xf32>
    %53 = arith.truncf %52 : vector<16x128xf32> to vector<16x128xbf16>
    %c2 = arith.constant 2 : index
    %c0_28 = arith.constant 0 : index
    %c0_29 = arith.constant 0 : index
    %54 = vector.load %arg9[%c2, %c0_28, %c0_29] : memref<10x128x128xbf16, #tpu.memory_space<vmem>>, vector<1x128x128xbf16>
    %55 = vector.shape_cast %54 : vector<1x128x128xbf16> to vector<128x128xbf16>
    %cst_30 = arith.constant dense<0.000000e+00> : vector<16x128xf32>
    %56 = tpu.matmul %53, %55, %cst_30 {dimension_numbers = #tpu.dot_dimension_numbers<[1], [0], [0], [1], [0, 0, 1, 1], [], []>} : vector<16x128xbf16>, vector<128x128xbf16>, vector<16x128xf32> -> vector<16x128xf32>
    %57 = vector.broadcast %31 : vector<1x128xf32> to vector<16x128xf32>
    %58 = arith.addf %56, %57 : vector<16x128xf32>
    %cst_31 = arith.constant 0.000000e+00 : f32
    %59 = vector.broadcast %cst_31 : f32 to vector<16x128xf32>
    %60 = arith.maximumf %58, %59 : vector<16x128xf32>
    %61 = math.absf %58 : vector<16x128xf32>
    %cst_32 = arith.constant 0.000000e+00 : f32
    %62 = vector.broadcast %cst_32 : f32 to vector<16x128xf32>
    %63 = arith.subf %62, %61 : vector<16x128xf32>
    %64 = math.exp %63 : vector<16x128xf32>
    %65 = math.log1p %64 : vector<16x128xf32>
    %66 = arith.addf %60, %65 : vector<16x128xf32>
    %cst_33 = arith.constant 0.693147182 : f32
    %67 = vector.broadcast %cst_33 : f32 to vector<16x128xf32>
    %68 = arith.subf %66, %67 : vector<16x128xf32>
    %69 = arith.truncf %68 : vector<16x128xf32> to vector<16x128xbf16>
    %c3 = arith.constant 3 : index
    %c0_34 = arith.constant 0 : index
    %c0_35 = arith.constant 0 : index
    %70 = vector.load %arg9[%c3, %c0_34, %c0_35] : memref<10x128x128xbf16, #tpu.memory_space<vmem>>, vector<1x128x128xbf16>
    %71 = vector.shape_cast %70 : vector<1x128x128xbf16> to vector<128x128xbf16>
    %cst_36 = arith.constant dense<0.000000e+00> : vector<16x128xf32>
    %72 = tpu.matmul %69, %71, %cst_36 {dimension_numbers = #tpu.dot_dimension_numbers<[1], [0], [0], [1], [0, 0, 1, 1], [], []>} : vector<16x128xbf16>, vector<128x128xbf16>, vector<16x128xf32> -> vector<16x128xf32>
    %73 = arith.addf %0, %72 : vector<16x128xf32>
    %74 = vector.broadcast %32 : vector<1x128xf32> to vector<16x128xf32>
    %75 = arith.addf %73, %74 : vector<16x128xf32>
    %76 = vector.extract_strided_slice %4 {offsets = [5, 0], sizes = [1, 128], strides = [1, 1]} : vector<11x128xf32> to vector<1x128xf32>
    %77 = vector.extract_strided_slice %4 {offsets = [6, 0], sizes = [1, 128], strides = [1, 1]} : vector<11x128xf32> to vector<1x128xf32>
    %78 = vector.extract_strided_slice %4 {offsets = [7, 0], sizes = [1, 128], strides = [1, 1]} : vector<11x128xf32> to vector<1x128xf32>
    %79 = vector.extract_strided_slice %4 {offsets = [8, 0], sizes = [1, 128], strides = [1, 1]} : vector<11x128xf32> to vector<1x128xf32>
    %80 = vector.extract_strided_slice %28 {offsets = [0, 128], sizes = [64, 128], strides = [1, 1]} : vector<64x256xf32> to vector<64x128xf32>
    %81 = arith.truncf %80 : vector<64x128xf32> to vector<64x128xbf16>
    %c4 = arith.constant 4 : index
    %c0_37 = arith.constant 0 : index
    %c0_38 = arith.constant 0 : index
    %82 = vector.load %arg9[%c4, %c0_37, %c0_38] : memref<10x128x128xbf16, #tpu.memory_space<vmem>>, vector<1x128x128xbf16>
    %83 = vector.shape_cast %82 : vector<1x128x128xbf16> to vector<128x128xbf16>
    %cst_39 = arith.constant dense<0.000000e+00> : vector<64x128xf32>
    %84 = tpu.matmul %81, %83, %cst_39 {dimension_numbers = #tpu.dot_dimension_numbers<[1], [0], [0], [1], [0, 0, 1, 1], [], []>} : vector<64x128xbf16>, vector<128x128xbf16>, vector<64x128xf32> -> vector<64x128xf32>
    %85 = vector.broadcast %76 : vector<1x128xf32> to vector<64x128xf32>
    %86 = arith.addf %84, %85 : vector<64x128xf32>
    %87 = arith.truncf %75 : vector<16x128xf32> to vector<16x128xbf16>
    %c5 = arith.constant 5 : index
    %c0_40 = arith.constant 0 : index
    %c0_41 = arith.constant 0 : index
    %88 = vector.load %arg9[%c5, %c0_40, %c0_41] : memref<10x128x128xbf16, #tpu.memory_space<vmem>>, vector<1x128x128xbf16>
    %89 = vector.shape_cast %88 : vector<1x128x128xbf16> to vector<128x128xbf16>
    %cst_42 = arith.constant dense<0.000000e+00> : vector<16x128xf32>
    %90 = tpu.matmul %87, %89, %cst_42 {dimension_numbers = #tpu.dot_dimension_numbers<[1], [0], [0], [1], [0, 0, 1, 1], [], []>} : vector<16x128xbf16>, vector<128x128xbf16>, vector<16x128xf32> -> vector<16x128xf32>
    %91 = vector.broadcast %77 : vector<1x128xf32> to vector<16x128xf32>
    %92 = arith.addf %90, %91 : vector<16x128xf32>
    %93 = arith.mulf %92, %1 : vector<16x128xf32>
    %94 = arith.truncf %93 : vector<16x128xf32> to vector<16x128xbf16>
    %cst_43 = arith.constant dense<0.000000e+00> : vector<128x128xf32>
    %95 = tpu.matmul %2, %94, %cst_43 {dimension_numbers = #tpu.dot_dimension_numbers<[1], [0], [0], [1], [0, 0, 1, 1], [], []>} : vector<128x16xbf16>, vector<16x128xbf16>, vector<128x128xf32> -> vector<128x128xf32>
    %96 = tpu.concatenate %86, %86 in 0 : vector<64x128xf32>, vector<64x128xf32> -> vector<128x128xf32>
    %97 = arith.mulf %95, %96 : vector<128x128xf32>
    %98 = arith.truncf %97 : vector<128x128xf32> to vector<128x128xbf16>
    %cst_44 = arith.constant dense<0.000000e+00> : vector<16x128xf32>
    %99 = tpu.matmul %3, %98, %cst_44 {dimension_numbers = #tpu.dot_dimension_numbers<[1], [0], [0], [1], [0, 0, 1, 1], [], []>} : vector<16x128xbf16>, vector<128x128xbf16>, vector<16x128xf32> -> vector<16x128xf32>
    %100 = arith.truncf %99 : vector<16x128xf32> to vector<16x128xbf16>
    %c6 = arith.constant 6 : index
    %c0_45 = arith.constant 0 : index
    %c0_46 = arith.constant 0 : index
    %101 = vector.load %arg9[%c6, %c0_45, %c0_46] : memref<10x128x128xbf16, #tpu.memory_space<vmem>>, vector<1x128x128xbf16>
    %102 = vector.shape_cast %101 : vector<1x128x128xbf16> to vector<128x128xbf16>
    %cst_47 = arith.constant dense<0.000000e+00> : vector<16x128xf32>
    %103 = tpu.matmul %100, %102, %cst_47 {dimension_numbers = #tpu.dot_dimension_numbers<[1], [0], [0], [1], [0, 0, 1, 1], [], []>} : vector<16x128xbf16>, vector<128x128xbf16>, vector<16x128xf32> -> vector<16x128xf32>
    %104 = vector.broadcast %78 : vector<1x128xf32> to vector<16x128xf32>
    %105 = arith.addf %103, %104 : vector<16x128xf32>
    %cst_48 = arith.constant 0.000000e+00 : f32
    %106 = vector.broadcast %cst_48 : f32 to vector<16x128xf32>
    %107 = arith.maximumf %105, %106 : vector<16x128xf32>
    %108 = math.absf %105 : vector<16x128xf32>
    %cst_49 = arith.constant 0.000000e+00 : f32
    %109 = vector.broadcast %cst_49 : f32 to vector<16x128xf32>
    %110 = arith.subf %109, %108 : vector<16x128xf32>
    %111 = math.exp %110 : vector<16x128xf32>
    %112 = math.log1p %111 : vector<16x128xf32>
    %113 = arith.addf %107, %112 : vector<16x128xf32>
    %cst_50 = arith.constant 0.693147182 : f32
    %114 = vector.broadcast %cst_50 : f32 to vector<16x128xf32>
    %115 = arith.subf %113, %114 : vector<16x128xf32>
    %116 = arith.truncf %115 : vector<16x128xf32> to vector<16x128xbf16>
    %c7 = arith.constant 7 : index
    %c0_51 = arith.constant 0 : index
    %c0_52 = arith.constant 0 : index
    %117 = vector.load %arg9[%c7, %c0_51, %c0_52] : memref<10x128x128xbf16, #tpu.memory_space<vmem>>, vector<1x128x128xbf16>
    %118 = vector.shape_cast %117 : vector<1x128x128xbf16> to vector<128x128xbf16>
    %cst_53 = arith.constant dense<0.000000e+00> : vector<16x128xf32>
    %119 = tpu.matmul %116, %118, %cst_53 {dimension_numbers = #tpu.dot_dimension_numbers<[1], [0], [0], [1], [0, 0, 1, 1], [], []>} : vector<16x128xbf16>, vector<128x128xbf16>, vector<16x128xf32> -> vector<16x128xf32>
    %120 = arith.addf %75, %119 : vector<16x128xf32>
    %121 = vector.broadcast %79 : vector<1x128xf32> to vector<16x128xf32>
    %122 = arith.addf %120, %121 : vector<16x128xf32>
    %123 = vector.extract_strided_slice %4 {offsets = [9, 0], sizes = [1, 128], strides = [1, 1]} : vector<11x128xf32> to vector<1x128xf32>
    %124 = vector.extract_strided_slice %4 {offsets = [10, 0], sizes = [1, 128], strides = [1, 1]} : vector<11x128xf32> to vector<1x128xf32>
    %125 = arith.truncf %122 : vector<16x128xf32> to vector<16x128xbf16>
    %c8 = arith.constant 8 : index
    %c0_54 = arith.constant 0 : index
    %c0_55 = arith.constant 0 : index
    %126 = vector.load %arg9[%c8, %c0_54, %c0_55] : memref<10x128x128xbf16, #tpu.memory_space<vmem>>, vector<1x128x128xbf16>
    %127 = vector.shape_cast %126 : vector<1x128x128xbf16> to vector<128x128xbf16>
    %cst_56 = arith.constant dense<0.000000e+00> : vector<16x128xf32>
    %128 = tpu.matmul %125, %127, %cst_56 {dimension_numbers = #tpu.dot_dimension_numbers<[1], [0], [0], [1], [0, 0, 1, 1], [], []>} : vector<16x128xbf16>, vector<128x128xbf16>, vector<16x128xf32> -> vector<16x128xf32>
    %129 = vector.broadcast %123 : vector<1x128xf32> to vector<16x128xf32>
    %130 = arith.addf %128, %129 : vector<16x128xf32>
    %cst_57 = arith.constant 0.000000e+00 : f32
    %131 = vector.broadcast %cst_57 : f32 to vector<16x128xf32>
    %132 = arith.maximumf %130, %131 : vector<16x128xf32>
    %133 = math.absf %130 : vector<16x128xf32>
    %cst_58 = arith.constant 0.000000e+00 : f32
    %134 = vector.broadcast %cst_58 : f32 to vector<16x128xf32>
    %135 = arith.subf %134, %133 : vector<16x128xf32>
    %136 = math.exp %135 : vector<16x128xf32>
    %137 = math.log1p %136 : vector<16x128xf32>
    %138 = arith.addf %132, %137 : vector<16x128xf32>
    %cst_59 = arith.constant 0.693147182 : f32
    %139 = vector.broadcast %cst_59 : f32 to vector<16x128xf32>
    %140 = arith.subf %138, %139 : vector<16x128xf32>
    %141 = arith.truncf %140 : vector<16x128xf32> to vector<16x128xbf16>
    %c9 = arith.constant 9 : index
    %c0_60 = arith.constant 0 : index
    %c0_61 = arith.constant 0 : index
    %142 = vector.load %arg9[%c9, %c0_60, %c0_61] : memref<10x128x128xbf16, #tpu.memory_space<vmem>>, vector<1x128x128xbf16>
    %143 = vector.shape_cast %142 : vector<1x128x128xbf16> to vector<128x128xbf16>
    %cst_62 = arith.constant dense<0.000000e+00> : vector<16x128xf32>
    %144 = tpu.matmul %141, %143, %cst_62 {dimension_numbers = #tpu.dot_dimension_numbers<[1], [0], [0], [1], [0, 0, 1, 1], [], []>} : vector<16x128xbf16>, vector<128x128xbf16>, vector<16x128xf32> -> vector<16x128xf32>
    %145 = vector.broadcast %124 : vector<1x128xf32> to vector<16x128xf32>
    %146 = arith.addf %144, %145 : vector<16x128xf32>
    %c0_63 = arith.constant 0 : index
    %c0_64 = arith.constant 0 : index
    %147 = vector.load %arg5[%c0_63, %c0_64] : memref<8x16xbf16, #tpu.memory_space<vmem>>, vector<8x16xbf16>
    %148 = arith.truncf %146 : vector<16x128xf32> to vector<16x128xbf16>
    %cst_65 = arith.constant dense<0.000000e+00> : vector<8x128xf32>
    %149 = tpu.matmul %147, %148, %cst_65 {dimension_numbers = #tpu.dot_dimension_numbers<[1], [0], [0], [1], [0, 0, 1, 1], [], []>} : vector<8x16xbf16>, vector<16x128xbf16>, vector<8x128xf32> -> vector<8x128xf32>
    %c0_66 = arith.constant 0 : index
    %c0_67 = arith.constant 0 : index
    %150 = vector.load %arg10[%c0_66, %c0_67] : memref<8x128xf32, #tpu.memory_space<vmem>>, vector<8x128xf32>
    tpu.vector_store %arg10[%c0_66, %c0_67], %149 {strides = array<i32>} : memref<8x128xf32, #tpu.memory_space<vmem>>, vector<8x128xf32>,
    return
  }
}

</mosaic_0001>

<llo_original>
// kernel: _lambda_.1
$region0: #{_lambda_.1}
  #allocation0 [shape = 'u32[]', space=smem, size = 0x4, offset = 0x4, fixed_abs, tag = 'smem constant byte address 0x4 - core index']
  #allocation1 [shape = 'u32[144,128]{1,0:T(1,128)}', space=vmem, size = 0x12000, scoped, tag = 'internal scratch']
  %s0 = inlined_call_operand.vmem [shape: f32[16,128], index: 0, kind: input, shape index: {}]
  %s1 = inlined_call_operand.vmem [shape: f32[64,128], index: 1, kind: input, shape index: {}]
  %s2 = inlined_call_operand.vmem [shape: f32[16,128], index: 2, kind: input, shape index: {}]
  %s3 = inlined_call_operand.vmem [shape: bf16[128,16], index: 3, kind: input, shape index: {}]
  %s4 = inlined_call_operand.vmem [shape: bf16[16,128], index: 4, kind: input, shape index: {}]
  %s5 = inlined_call_operand.vmem [shape: bf16[8,16], index: 5, kind: input, shape index: {}]
  %s6 = inlined_call_operand.vmem [shape: bf16[128,256], index: 6, kind: input, shape index: {}]
  %s7 = inlined_call_operand.vmem [shape: f32[1,256], index: 7, kind: input, shape index: {}]
  %s8 = inlined_call_operand.vmem [shape: f32[11,128], index: 8, kind: input, shape index: {}]
  %s9 = inlined_call_operand.vmem [shape: bf16[10,128,128], index: 9, kind: input, shape index: {}]
  %s10 = inlined_call_operand.vmem [shape: f32[8,128], index: 10, kind: output, shape index: {}]
  %s11 = sld [smem:[#allocation0]]
  $region50: #{_lambda_.1} parent=0
    _
  %s13 = ssub.s32 1, %s11
  %s14 = scalar_select 0, %s13, %s11
  // Predicated region
  $region2: #{_lambda_.1} parent=0 // pred_check
    _
  $region3: #{_lambda_.1} parent=0 // pred_check_branch
    %16 = sbr.rel (0) target = $region5
  $region4: #{_lambda_.1} parent=0 // pred_region
    _
  $region5: #{_lambda_.1} parent=0 // pred_fallthru
    _
  // Predicated region
  $region6: #{_lambda_.1} parent=0 // pred_check
    _
  $region7: #{_lambda_.1} parent=0 // pred_check_branch
    %18 = sbr.rel (0) target = $region9
  $region8: #{_lambda_.1} parent=0 // pred_region
    _
  $region9: #{_lambda_.1} parent=0 // pred_fallthru
    _
  // Predicated region
  $region10: #{_lambda_.1} parent=0 // pred_check
    _
  $region11: #{_lambda_.1} parent=0 // pred_check_branch
    %20 = sbr.rel (0) target = $region13
  $region12: #{_lambda_.1} parent=0 // pred_region
    _
  $region13: #{_lambda_.1} parent=0 // pred_fallthru
    _
  // Predicated region
  $region14: #{_lambda_.1} parent=0 // pred_check
    _
  $region15: #{_lambda_.1} parent=0 // pred_check_branch
    %22 = sbr.rel (0) target = $region17
  $region16: #{_lambda_.1} parent=0 // pred_region
    _
  $region17: #{_lambda_.1} parent=0 // pred_fallthru
    _
  // Predicated region
  $region18: #{_lambda_.1} parent=0 // pred_check
    _
  $region19: #{_lambda_.1} parent=0 // pred_check_branch
    %24 = sbr.rel (0) target = $region21
  $region20: #{_lambda_.1} parent=0 // pred_region
    _
  $region21: #{_lambda_.1} parent=0 // pred_fallthru
    _
  // Predicated region
  $region22: #{_lambda_.1} parent=0 // pred_check
    _
  $region23: #{_lambda_.1} parent=0 // pred_check_branch
    %26 = sbr.rel (0) target = $region25
  $region24: #{_lambda_.1} parent=0 // pred_region
    _
  $region25: #{_lambda_.1} parent=0 // pred_fallthru
    _
  // Predicated region
  $region26: #{_lambda_.1} parent=0 // pred_check
    _
  $region27: #{_lambda_.1} parent=0 // pred_check_branch
    %28 = sbr.rel (0) target = $region29
  $region28: #{_lambda_.1} parent=0 // pred_region
    _
  $region29: #{_lambda_.1} parent=0 // pred_fallthru
    _
  // Predicated region
  $region30: #{_lambda_.1} parent=0 // pred_check
    _
  $region31: #{_lambda_.1} parent=0 // pred_check_branch
    %30 = sbr.rel (0) target = $region33
  $region32: #{_lambda_.1} parent=0 // pred_region
    _
  $region33: #{_lambda_.1} parent=0 // pred_fallthru
    _
  // Predicated region
  $region34: #{_lambda_.1} parent=0 // pred_check
    _
  $region35: #{_lambda_.1} parent=0 // pred_check_branch
    %32 = sbr.rel (0) target = $region37
  $region36: #{_lambda_.1} parent=0 // pred_region
    _
  $region37: #{_lambda_.1} parent=0 // pred_fallthru
    _
  // Predicated region
  $region38: #{_lambda_.1} parent=0 // pred_check
    _
  $region39: #{_lambda_.1} parent=0 // pred_check_branch
    %34 = sbr.rel (0) target = $region41
  $region40: #{_lambda_.1} parent=0 // pred_region
    _
  $region41: #{_lambda_.1} parent=0 // pred_fallthru
    _
  %v36 = vld [vmem:[%s0] sm:$0xff]
  %v37 = vld [vmem:[%s0 + $0x8] sm:$0xff]
  %v38 = vld [vmem:[%s2] sm:$0xff]
  %v39 = vld [vmem:[%s2 + $0x8] sm:$0xff]
  %v40 = vld [vmem:[%s3] sm:$0xf]
  %v41 = vld [vmem:[%s3 + $0x4] sm:$0xf]
  %v42 = vld [vmem:[%s3 + $0x8] sm:$0xf]
  %v43 = vld [vmem:[%s3 + $0xc] sm:$0xf]
  %v44 = vld [vmem:[%s3 + $0x10] sm:$0xf]
  %v45 = vld [vmem:[%s3 + $0x14] sm:$0xf]
  %v46 = vld [vmem:[%s3 + $0x18] sm:$0xf]
  %v47 = vld [vmem:[%s3 + $0x1c] sm:$0xf]
  %v48 = vld [vmem:[%s3 + $0x20] sm:$0xf]
  %v49 = vld [vmem:[%s3 + $0x24] sm:$0xf]
  %v50 = vld [vmem:[%s3 + $0x28] sm:$0xf]
  %v51 = vld [vmem:[%s3 + $0x2c] sm:$0xf]
  %v52 = vld [vmem:[%s3 + $0x30] sm:$0xf]
  %v53 = vld [vmem:[%s3 + $0x34] sm:$0xf]
  %v54 = vld [vmem:[%s3 + $0x38] sm:$0xf]
  %v55 = vld [vmem:[%s3 + $0x3c] sm:$0xf]
  %v56 = vld [vmem:[%s4] sm:$0xf]
  %v57 = vld [vmem:[%s4 + $0x4] sm:$0xf]
  %v58 = vld [vmem:[%s8] sm:$0xff]
  %v59 = vld [vmem:[%s8 + $0x8] sm:$0x7]
  %v60 = vld [vmem:[%s1] sm:$0xff]
  %v61 = vld [vmem:[%s1 + $0x8] sm:$0xff]
  %v62 = vld [vmem:[%s1 + $0x10] sm:$0xff]
  %v63 = vld [vmem:[%s1 + $0x18] sm:$0xff]
  %v64 = vld [vmem:[%s1 + $0x20] sm:$0xff]
  %v65 = vld [vmem:[%s1 + $0x28] sm:$0xff]
  %v66 = vld [vmem:[%s1 + $0x30] sm:$0xff]
  %v67 = vld [vmem:[%s1 + $0x38] sm:$0xff]
  %v68 = vlaneseq
  %v69 = vshrl.u32 %v68, 7
  %v70 = vsub.s32 0, %v69
  %v71 = vrot.slane %v58, %v70
  %v72 = vsub.f32 %v60, %v71
  %v73 = vsub.f32 %v61, %v71
  %v74 = vsub.f32 %v62, %v71
  %v75 = vsub.f32 %v63, %v71
  %v76 = vsub.f32 %v64, %v71
  %v77 = vsub.f32 %v65, %v71
  %v78 = vsub.f32 %v66, %v71
  %v79 = vsub.f32 %v67, %v71
  %v80 = vmul.f32 %v72, %v72
  %v81 = vmul.f32 %v73, %v73
  %v82 = vmul.f32 %v74, %v74
  %v83 = vmul.f32 %v75, %v75
  %v84 = vmul.f32 %v76, %v76
  %v85 = vmul.f32 %v77, %v77
  %v86 = vmul.f32 %v78, %v78
  %v87 = vmul.f32 %v79, %v79
  %v88 = vmul.f32 %v80, -19.22
  %v89 = vmul.f32 %v81, -19.22
  %v90 = vmul.f32 %v82, -19.22
  %v91 = vmul.f32 %v83, -19.22
  %v92 = vmul.f32 %v84, -19.22
  %v93 = vmul.f32 %v85, -19.22
  %v94 = vmul.f32 %v86, -19.22
  %v95 = vmul.f32 %v87, -19.22
  %v96 = vmul.f32 %v88, 1.442695
  %v97 = vpow.pop %v96
  %v98 = vmul.f32 %v89, 1.442695
  %v99 = vpow.pop %v98
  %v100 = vmul.f32 %v90, 1.442695
  %v101 = vpow.pop %v100
  %v102 = vmul.f32 %v91, 1.442695
  %v103 = vpow.pop %v102
  %v104 = vmul.f32 %v92, 1.442695
  %v105 = vpow.pop %v104
  %v106 = vmul.f32 %v93, 1.442695
  %v107 = vpow.pop %v106
  %v108 = vmul.f32 %v94, 1.442695
  %v109 = vpow.pop %v108
  %v110 = vmul.f32 %v95, 1.442695
  %v111 = vpow.pop %v110
  %v112 = vpack.c.bf16 %v99, %v97
  %v113 = vpack.c.bf16 %v103, %v101
  %v114 = vpack.c.bf16 %v107, %v105
  %v115 = vpack.c.bf16 %v111, %v109
  %v116 = vld [vmem:[%s6] sm:$0xff]
  %v117 = vld [vmem:[%s6 + $0x8] sm:$0xff]
  %v118 = vld [vmem:[%s6 + $0x10] sm:$0xff]
  %v119 = vld [vmem:[%s6 + $0x18] sm:$0xff]
  %v120 = vld [vmem:[%s6 + $0x20] sm:$0xff]
  %v121 = vld [vmem:[%s6 + $0x28] sm:$0xff]
  %v122 = vld [vmem:[%s6 + $0x30] sm:$0xff]
  %v123 = vld [vmem:[%s6 + $0x38] sm:$0xff]
  %v124 = vld [vmem:[%s6 + $0x40] sm:$0xff]
  %v125 = vld [vmem:[%s6 + $0x48] sm:$0xff]
  %v126 = vld [vmem:[%s6 + $0x50] sm:$0xff]
  %v127 = vld [vmem:[%s6 + $0x58] sm:$0xff]
  %v128 = vld [vmem:[%s6 + $0x60] sm:$0xff]
  %v129 = vld [vmem:[%s6 + $0x68] sm:$0xff]
  %v130 = vld [vmem:[%s6 + $0x70] sm:$0xff]
  %v131 = vld [vmem:[%s6 + $0x78] sm:$0xff]
  %v132 = vld [vmem:[%s7] sm:$0x3]
  %v134 = vlaneseq
  %v135 = vshrl.u32 %v134, 7
  %v136 = vsub.s32 0, %v135
  %v137 = vrot.slane %v132, %v136
  %v138 = vlaneseq
  %v139 = vshrl.u32 %v138, 7
  %v140 = vsub.s32 1, %v139
  %v141 = vrot.slane %v132, %v140
  %v160 = vunpack.c.l.b16 %v116
  %v161 = vunpack.c.h.b16 %v116
  %v162 = vunpack.c.l.b16 %v117
  %v163 = vunpack.c.h.b16 %v117
  %v164 = vunpack.c.l.b16 %v118
  %v165 = vunpack.c.h.b16 %v118
  %v166 = vunpack.c.l.b16 %v119
  %v167 = vunpack.c.h.b16 %v119
  %v168 = vunpack.c.l.b16 %v120
  %v169 = vunpack.c.h.b16 %v120
  %v170 = vunpack.c.l.b16 %v121
  %v171 = vunpack.c.h.b16 %v121
  %v172 = vunpack.c.l.b16 %v122
  %v173 = vunpack.c.h.b16 %v122
  %v174 = vunpack.c.l.b16 %v123
  %v175 = vunpack.c.h.b16 %v123
  %v176 = vunpack.c.l.b16 %v124
  %v177 = vunpack.c.h.b16 %v124
  %v178 = vunpack.c.l.b16 %v125
  %v179 = vunpack.c.h.b16 %v125
  %v180 = vunpack.c.l.b16 %v126
  %v181 = vunpack.c.h.b16 %v126
  %v182 = vunpack.c.l.b16 %v127
  %v183 = vunpack.c.h.b16 %v127
  %v184 = vunpack.c.l.b16 %v128
  %v185 = vunpack.c.h.b16 %v128
  %v186 = vunpack.c.l.b16 %v129
  %v187 = vunpack.c.h.b16 %v129
  %v188 = vunpack.c.l.b16 %v130
  %v189 = vunpack.c.h.b16 %v130
  %v190 = vunpack.c.l.b16 %v131
  %v191 = vunpack.c.h.b16 %v131
  %v192 = vpack.c.b16 %v162, %v160
  %v193 = vpack.c.b16 %v163, %v161
  %v194 = vpack.c.b16 %v166, %v164
  %v195 = vpack.c.b16 %v167, %v165
  %v196 = vpack.c.b16 %v170, %v168
  %v197 = vpack.c.b16 %v171, %v169
  %v198 = vpack.c.b16 %v174, %v172
  %v199 = vpack.c.b16 %v175, %v173
  %v200 = vpack.c.b16 %v178, %v176
  %v201 = vpack.c.b16 %v179, %v177
  %v202 = vpack.c.b16 %v182, %v180
  %v203 = vpack.c.b16 %v183, %v181
  %v204 = vpack.c.b16 %v186, %v184
  %v205 = vpack.c.b16 %v187, %v185
  %v206 = vpack.c.b16 %v190, %v188
  %v207 = vpack.c.b16 %v191, %v189
  %224 = vmatprep.subr.bf16.mxu0 %v207
  %225 = vmatpush1.bf16.msra.mxu0 %v206
  %226 = vmatprep.subr.bf16.mxu0 %v205
  %227 = vmatpush1.bf16.msra.mxu0 %v204
  %228 = vmatprep.subr.bf16.mxu0 %v203
  %229 = vmatpush1.bf16.msra.mxu0 %v202
  %230 = vmatprep.subr.bf16.mxu0 %v201
  %231 = vmatpush1.bf16.msra.mxu0 %v200
  %232 = vmatprep.subr.bf16.mxu0 %v199
  %233 = vmatpush1.bf16.msra.mxu0 %v198
  %234 = vmatprep.subr.bf16.mxu0 %v197
  %235 = vmatpush1.bf16.msra.mxu0 %v196
  %236 = vmatprep.subr.bf16.mxu0 %v195
  %237 = vmatpush1.bf16.msra.mxu0 %v194
  %238 = vmatprep.subr.bf16.mxu0 %v193
  %239 = vmatpush1.bf16.msra.mxu0 %v192
  %240 = vmatprep.subr.bf16.mxu0 0
  %241 = vmatpush2.bf16.msra.mxu0 0
  %242 = vmatprep.subr.bf16.mxu0 0
  %243 = vmatpush2.bf16.msra.mxu0 0
  %244 = vmatprep.subr.bf16.mxu0 0
  %245 = vmatpush2.bf16.msra.mxu0 0
  %246 = vmatprep.subr.bf16.mxu0 0
  %247 = vmatpush2.bf16.msra.mxu0 0
  %248 = vmatprep.subr.bf16.mxu0 0
  %249 = vmatpush2.bf16.msra.mxu0 0
  %250 = vmatprep.subr.bf16.mxu0 0
  %251 = vmatpush2.bf16.msra.mxu0 0
  %252 = vmatprep.subr.bf16.mxu0 0
  %253 = vmatpush2.bf16.msra.mxu0 0
  %254 = vmatprep.subr.bf16.mxu0 0
  %255 = vmatpush2.bf16.msra.mxu0 0
  %256 = vmatprep.mubr.bf16.mxu0 0
  %257 = vmatmul.mubr.bf16.gmra.mxu0 %v112
  %v258 = vpop.f32.mrf.mxu0
  %v259 = vadd.f32 %v137, %v258
  %v260 = vpop.f32.mrf.mxu0
  %v261 = vadd.f32 %v141, %v260
  %v262 = vpop.f32.mrf.mxu0
  %v263 = vadd.f32 %v137, %v262
  %v264 = vpop.f32.mrf.mxu0
  %v265 = vadd.f32 %v141, %v264
  %266 = vmatprep.mubr.bf16.mxu0 0
  %267 = vmatmul.mubr.bf16.gmra.mxu0 %v113
  %v268 = vpop.f32.mrf.mxu0
  %v269 = vadd.f32 %v137, %v268
  %v270 = vpop.f32.mrf.mxu0
  %v271 = vadd.f32 %v141, %v270
  %v272 = vpop.f32.mrf.mxu0
  %v273 = vadd.f32 %v137, %v272
  %v274 = vpop.f32.mrf.mxu0
  %v275 = vadd.f32 %v141, %v274
  %276 = vmatprep.mubr.bf16.mxu0 0
  %277 = vmatmul.mubr.bf16.gmra.mxu0 %v114
  %v278 = vpop.f32.mrf.mxu0
  %v279 = vadd.f32 %v137, %v278
  %v280 = vpop.f32.mrf.mxu0
  %v281 = vadd.f32 %v141, %v280
  %v282 = vpop.f32.mrf.mxu0
  %v283 = vadd.f32 %v137, %v282
  %v284 = vpop.f32.mrf.mxu0
  %v285 = vadd.f32 %v141, %v284
  %286 = vmatprep.mubr.bf16.mxu0 0
  %287 = vmatmul.mubr.bf16.gmra.mxu0 %v115
  %v288 = vpop.f32.mrf.mxu0
  %v289 = vadd.f32 %v137, %v288
  %v290 = vpop.f32.mrf.mxu0
  %v291 = vadd.f32 %v141, %v290
  %v292 = vpop.f32.mrf.mxu0
  %v293 = vadd.f32 %v137, %v292
  %v294 = vpop.f32.mrf.mxu0
  %v295 = vadd.f32 %v141, %v294
  %296 = vdwg.mxu0
  %v297 = vmax.f32 %v259, 0.0
  %v298 = vmax.f32 %v261, 0.0
  %v299 = vmax.f32 %v263, 0.0
  %v300 = vmax.f32 %v265, 0.0
  %v301 = vmax.f32 %v269, 0.0
  %v302 = vmax.f32 %v271, 0.0
  %v303 = vmax.f32 %v273, 0.0
  %v304 = vmax.f32 %v275, 0.0
  %v305 = vmax.f32 %v279, 0.0
  %v306 = vmax.f32 %v281, 0.0
  %v307 = vmax.f32 %v283, 0.0
  %v308 = vmax.f32 %v285, 0.0
  %v309 = vmax.f32 %v289, 0.0
  %v310 = vmax.f32 %v291, 0.0
  %v311 = vmax.f32 %v293, 0.0
  %v312 = vmax.f32 %v295, 0.0
  %v313 = vand.u32 2147483647, %v259
  %v314 = vand.u32 2147483647, %v261
  %v315 = vand.u32 2147483647, %v263
  %v316 = vand.u32 2147483647, %v265
  %v317 = vand.u32 2147483647, %v269
  %v318 = vand.u32 2147483647, %v271
  %v319 = vand.u32 2147483647, %v273
  %v320 = vand.u32 2147483647, %v275
  %v321 = vand.u32 2147483647, %v279
  %v322 = vand.u32 2147483647, %v281
  %v323 = vand.u32 2147483647, %v283
  %v324 = vand.u32 2147483647, %v285
  %v325 = vand.u32 2147483647, %v289
  %v326 = vand.u32 2147483647, %v291
  %v327 = vand.u32 2147483647, %v293
  %v328 = vand.u32 2147483647, %v295
  %v329 = vsub.f32 0.0, %v313
  %v330 = vsub.f32 0.0, %v314
  %v331 = vsub.f32 0.0, %v315
  %v332 = vsub.f32 0.0, %v316
  %v333 = vsub.f32 0.0, %v317
  %v334 = vsub.f32 0.0, %v318
  %v335 = vsub.f32 0.0, %v319
  %v336 = vsub.f32 0.0, %v320
  %v337 = vsub.f32 0.0, %v321
  %v338 = vsub.f32 0.0, %v322
  %v339 = vsub.f32 0.0, %v323
  %v340 = vsub.f32 0.0, %v324
  %v341 = vsub.f32 0.0, %v325
  %v342 = vsub.f32 0.0, %v326
  %v343 = vsub.f32 0.0, %v327
  %v344 = vsub.f32 0.0, %v328
  %v345 = vmul.f32 %v329, 1.442695
  %v346 = vpow.pop %v345
  %v347 = vmul.f32 %v330, 1.442695
  %v348 = vpow.pop %v347
  %v349 = vmul.f32 %v331, 1.442695
  %v350 = vpow.pop %v349
  %v351 = vmul.f32 %v332, 1.442695
  %v352 = vpow.pop %v351
  %v353 = vmul.f32 %v333, 1.442695
  %v354 = vpow.pop %v353
  %v355 = vmul.f32 %v334, 1.442695
  %v356 = vpow.pop %v355
  %v357 = vmul.f32 %v335, 1.442695
  %v358 = vpow.pop %v357
  %v359 = vmul.f32 %v336, 1.442695
  %v360 = vpow.pop %v359
  %v361 = vmul.f32 %v337, 1.442695
  %v362 = vpow.pop %v361
  %v363 = vmul.f32 %v338, 1.442695
  %v364 = vpow.pop %v363
  %v365 = vmul.f32 %v339, 1.442695
  %v366 = vpow.pop %v365
  %v367 = vmul.f32 %v340, 1.442695
  %v368 = vpow.pop %v367
  %v369 = vmul.f32 %v341, 1.442695
  %v370 = vpow.pop %v369
  %v371 = vmul.f32 %v342, 1.442695
  %v372 = vpow.pop %v371
  %v373 = vmul.f32 %v343, 1.442695
  %v374 = vpow.pop %v373
  %v375 = vmul.f32 %v344, 1.442695
  %v376 = vpow.pop %v375
  %v377 = vadd.f32 %v346, 1.0
  %v378 = vlog2.pop %v377
  %v379 = vmul.f32 %v378, 0.6931472
  %v380 = vmul.f32 -0.5, %v346
  %v381 = vadd.f32 %v380, 1.0
  %v382 = vmul.f32 %v381, %v346
  %v383 = vand.u32 2147483647, %v346
  %vm384 = vcmp.lt.f32.partialorder %v383, 0.0004427343
  %v385 = vsel %vm384, %v382, %v379
  %v386 = vadd.f32 %v348, 1.0
  %v387 = vlog2.pop %v386
  %v388 = vmul.f32 %v387, 0.6931472
  %v389 = vmul.f32 -0.5, %v348
  %v390 = vadd.f32 %v389, 1.0
  %v391 = vmul.f32 %v390, %v348
  %v392 = vand.u32 2147483647, %v348
  %vm393 = vcmp.lt.f32.partialorder %v392, 0.0004427343
  %v394 = vsel %vm393, %v391, %v388
  %v395 = vadd.f32 %v350, 1.0
  %v396 = vlog2.pop %v395
  %v397 = vmul.f32 %v396, 0.6931472
  %v398 = vmul.f32 -0.5, %v350
  %v399 = vadd.f32 %v398, 1.0
  %v400 = vmul.f32 %v399, %v350
  %v401 = vand.u32 2147483647, %v350
  %vm402 = vcmp.lt.f32.partialorder %v401, 0.0004427343
  %v403 = vsel %vm402, %v400, %v397
  %v404 = vadd.f32 %v352, 1.0
  %v405 = vlog2.pop %v404
  %v406 = vmul.f32 %v405, 0.6931472
  %v407 = vmul.f32 -0.5, %v352
  %v408 = vadd.f32 %v407, 1.0
  %v409 = vmul.f32 %v408, %v352
  %v410 = vand.u32 2147483647, %v352
  %vm411 = vcmp.lt.f32.partialorder %v410, 0.0004427343
  %v412 = vsel %vm411, %v409, %v406
  %v413 = vadd.f32 %v354, 1.0
  %v414 = vlog2.pop %v413
  %v415 = vmul.f32 %v414, 0.6931472
  %v416 = vmul.f32 -0.5, %v354
  %v417 = vadd.f32 %v416, 1.0
  %v418 = vmul.f32 %v417, %v354
  %v419 = vand.u32 2147483647, %v354
  %vm420 = vcmp.lt.f32.partialorder %v419, 0.0004427343
  %v421 = vsel %vm420, %v418, %v415
  %v422 = vadd.f32 %v356, 1.0
  %v423 = vlog2.pop %v422
  %v424 = vmul.f32 %v423, 0.6931472
  %v425 = vmul.f32 -0.5, %v356
  %v426 = vadd.f32 %v425, 1.0
  %v427 = vmul.f32 %v426, %v356
  %v428 = vand.u32 2147483647, %v356
  %vm429 = vcmp.lt.f32.partialorder %v428, 0.0004427343
  %v430 = vsel %vm429, %v427, %v424
  %v431 = vadd.f32 %v358, 1.0
  %v432 = vlog2.pop %v431
  %v433 = vmul.f32 %v432, 0.6931472
  %v434 = vmul.f32 -0.5, %v358
  %v435 = vadd.f32 %v434, 1.0
  %v436 = vmul.f32 %v435, %v358
  %v437 = vand.u32 2147483647, %v358
  %vm438 = vcmp.lt.f32.partialorder %v437, 0.0004427343
  %v439 = vsel %vm438, %v436, %v433
  %v440 = vadd.f32 %v360, 1.0
  %v441 = vlog2.pop %v440
  %v442 = vmul.f32 %v441, 0.6931472
  %v443 = vmul.f32 -0.5, %v360
  %v444 = vadd.f32 %v443, 1.0
  %v445 = vmul.f32 %v444, %v360
  %v446 = vand.u32 2147483647, %v360
  %vm447 = vcmp.lt.f32.partialorder %v446, 0.0004427343
  %v448 = vsel %vm447, %v445, %v442
  %v449 = vadd.f32 %v362, 1.0
  %v450 = vlog2.pop %v449
  %v451 = vmul.f32 %v450, 0.6931472
  %v452 = vmul.f32 -0.5, %v362
  %v453 = vadd.f32 %v452, 1.0
  %v454 = vmul.f32 %v453, %v362
  %v455 = vand.u32 2147483647, %v362
  %vm456 = vcmp.lt.f32.partialorder %v455, 0.0004427343
  %v457 = vsel %vm456, %v454, %v451
  %v458 = vadd.f32 %v364, 1.0
  %v459 = vlog2.pop %v458
  %v460 = vmul.f32 %v459, 0.6931472
  %v461 = vmul.f32 -0.5, %v364
  %v462 = vadd.f32 %v461, 1.0
  %v463 = vmul.f32 %v462, %v364
  %v464 = vand.u32 2147483647, %v364
  %vm465 = vcmp.lt.f32.partialorder %v464, 0.0004427343
  %v466 = vsel %vm465, %v463, %v460
  %v467 = vadd.f32 %v366, 1.0
  %v468 = vlog2.pop %v467
  %v469 = vmul.f32 %v468, 0.6931472
  %v470 = vmul.f32 -0.5, %v366
  %v471 = vadd.f32 %v470, 1.0
  %v472 = vmul.f32 %v471, %v366
  %v473 = vand.u32 2147483647, %v366
  %vm474 = vcmp.lt.f32.partialorder %v473, 0.0004427343
  %v475 = vsel %vm474, %v472, %v469
  %v476 = vadd.f32 %v368, 1.0
  %v477 = vlog2.pop %v476
  %v478 = vmul.f32 %v477, 0.6931472
  %v479 = vmul.f32 -0.5, %v368
  %v480 = vadd.f32 %v479, 1.0
  %v481 = vmul.f32 %v480, %v368
  %v482 = vand.u32 2147483647, %v368
  %vm483 = vcmp.lt.f32.partialorder %v482, 0.0004427343
  %v484 = vsel %vm483, %v481, %v478
  %v485 = vadd.f32 %v370, 1.0
  %v486 = vlog2.pop %v485
  %v487 = vmul.f32 %v486, 0.6931472
  %v488 = vmul.f32 -0.5, %v370
  %v489 = vadd.f32 %v488, 1.0
  %v490 = vmul.f32 %v489, %v370
  %v491 = vand.u32 2147483647, %v370
  %vm492 = vcmp.lt.f32.partialorder %v491, 0.0004427343
  %v493 = vsel %vm492, %v490, %v487
  %v494 = vadd.f32 %v372, 1.0
  %v495 = vlog2.pop %v494
  %v496 = vmul.f32 %v495, 0.6931472
  %v497 = vmul.f32 -0.5, %v372
  %v498 = vadd.f32 %v497, 1.0
  %v499 = vmul.f32 %v498, %v372
  %v500 = vand.u32 2147483647, %v372
  %vm501 = vcmp.lt.f32.partialorder %v500, 0.0004427343
  %v502 = vsel %vm501, %v499, %v496
  %v503 = vadd.f32 %v374, 1.0
  %v504 = vlog2.pop %v503
  %v505 = vmul.f32 %v504, 0.6931472
  %v506 = vmul.f32 -0.5, %v374
  %v507 = vadd.f32 %v506, 1.0
  %v508 = vmul.f32 %v507, %v374
  %v509 = vand.u32 2147483647, %v374
  %vm510 = vcmp.lt.f32.partialorder %v509, 0.0004427343
  %v511 = vsel %vm510, %v508, %v505
  %v512 = vadd.f32 %v376, 1.0
  %v513 = vlog2.pop %v512
  %v514 = vmul.f32 %v513, 0.6931472
  %v515 = vmul.f32 -0.5, %v376
  %v516 = vadd.f32 %v515, 1.0
  %v517 = vmul.f32 %v516, %v376
  %v518 = vand.u32 2147483647, %v376
  %vm519 = vcmp.lt.f32.partialorder %v518, 0.0004427343
  %v520 = vsel %vm519, %v517, %v514
  %v521 = vadd.f32 %v297, %v385
  %v522 = vadd.f32 %v298, %v394
  %v523 = vadd.f32 %v299, %v403
  %v524 = vadd.f32 %v300, %v412
  %v525 = vadd.f32 %v301, %v421
  %v526 = vadd.f32 %v302, %v430
  %v527 = vadd.f32 %v303, %v439
  %v528 = vadd.f32 %v304, %v448
  %v529 = vadd.f32 %v305, %v457
  %v530 = vadd.f32 %v306, %v466
  %v531 = vadd.f32 %v307, %v475
  %v532 = vadd.f32 %v308, %v484
  %v533 = vadd.f32 %v309, %v493
  %v534 = vadd.f32 %v310, %v502
  %v535 = vadd.f32 %v311, %v511
  %v536 = vadd.f32 %v312, %v520
  %v537 = vsub.f32 %v521, 0.6931472
  %v538 = vsub.f32 %v522, 0.6931472
  %v539 = vsub.f32 %v523, 0.6931472
  %v540 = vsub.f32 %v524, 0.6931472
  %v541 = vsub.f32 %v525, 0.6931472
  %v542 = vsub.f32 %v526, 0.6931472
  %v543 = vsub.f32 %v527, 0.6931472
  %v544 = vsub.f32 %v528, 0.6931472
  %v545 = vsub.f32 %v529, 0.6931472
  %v546 = vsub.f32 %v530, 0.6931472
  %v547 = vsub.f32 %v531, 0.6931472
  %v548 = vsub.f32 %v532, 0.6931472
  %v549 = vsub.f32 %v533, 0.6931472
  %v550 = vsub.f32 %v534, 0.6931472
  %v551 = vsub.f32 %v535, 0.6931472
  %v552 = vsub.f32 %v536, 0.6931472
  %v553 = vpack.c.bf16 %v539, %v537
  %v554 = vpack.c.bf16 %v543, %v541
  %v555 = vpack.c.bf16 %v547, %v545
  %v556 = vpack.c.bf16 %v551, %v549
  %v557 = vld [vmem:[%s9] sm:$0xf]
  %v558 = vld [vmem:[%s9 + $0x4] sm:$0xf]
  %v559 = vld [vmem:[%s9 + $0x8] sm:$0xf]
  %v560 = vld [vmem:[%s9 + $0xc] sm:$0xf]
  %v561 = vld [vmem:[%s9 + $0x10] sm:$0xf]
  %v562 = vld [vmem:[%s9 + $0x14] sm:$0xf]
  %v563 = vld [vmem:[%s9 + $0x18] sm:$0xf]
  %v564 = vld [vmem:[%s9 + $0x1c] sm:$0xf]
  %v565 = vld [vmem:[%s9 + $0x20] sm:$0xf]
  %v566 = vld [vmem:[%s9 + $0x24] sm:$0xf]
  %v567 = vld [vmem:[%s9 + $0x28] sm:$0xf]
  %v568 = vld [vmem:[%s9 + $0x2c] sm:$0xf]
  %v569 = vld [vmem:[%s9 + $0x30] sm:$0xf]
  %v570 = vld [vmem:[%s9 + $0x34] sm:$0xf]
  %v571 = vld [vmem:[%s9 + $0x38] sm:$0xf]
  %v572 = vld [vmem:[%s9 + $0x3c] sm:$0xf]
  %v573 = vlaneseq
  %v574 = vshrl.u32 %v573, 7
  %v575 = vsub.s32 1, %v574
  %v576 = vrot.slane %v58, %v575
  %v593 = vunpack.c.l.b16 %v557
  %v594 = vunpack.c.l.b16 %v558
  %v595 = vunpack.c.l.b16 %v559
  %v596 = vunpack.c.l.b16 %v560
  %v597 = vunpack.c.l.b16 %v561
  %v598 = vunpack.c.l.b16 %v562
  %v599 = vunpack.c.l.b16 %v563
  %v600 = vunpack.c.l.b16 %v564
  %v601 = vunpack.c.l.b16 %v565
  %v602 = vunpack.c.l.b16 %v566
  %v603 = vunpack.c.l.b16 %v567
  %v604 = vunpack.c.l.b16 %v568
  %v605 = vunpack.c.l.b16 %v569
  %v606 = vunpack.c.l.b16 %v570
  %v607 = vunpack.c.l.b16 %v571
  %v608 = vunpack.c.l.b16 %v572
  %v609 = vpack.c.b16 %v594, %v593
  %v610 = vpack.c.b16 %v596, %v595
  %v611 = vpack.c.b16 %v598, %v597
  %v612 = vpack.c.b16 %v600, %v599
  %v613 = vpack.c.b16 %v602, %v601
  %v614 = vpack.c.b16 %v604, %v603
  %v615 = vpack.c.b16 %v606, %v605
  %v616 = vpack.c.b16 %v608, %v607
  %625 = vmatprep.subr.bf16.mxu0 0
  %626 = vmatpush1.bf16.msra.mxu0 %v616
  %627 = vmatprep.subr.bf16.mxu0 0
  %628 = vmatpush1.bf16.msra.mxu0 %v615
  %629 = vmatprep.subr.bf16.mxu0 0
  %630 = vmatpush1.bf16.msra.mxu0 %v614
  %631 = vmatprep.subr.bf16.mxu0 0
  %632 = vmatpush1.bf16.msra.mxu0 %v613
  %633 = vmatprep.subr.bf16.mxu0 0
  %634 = vmatpush1.bf16.msra.mxu0 %v612
  %635 = vmatprep.subr.bf16.mxu0 0
  %636 = vmatpush1.bf16.msra.mxu0 %v611
  %637 = vmatprep.subr.bf16.mxu0 0
  %638 = vmatpush1.bf16.msra.mxu0 %v610
  %639 = vmatprep.subr.bf16.mxu0 0
  %640 = vmatpush1.bf16.msra.mxu0 %v609
  %641 = vmatprep.subr.bf16.mxu0 0
  %642 = vmatpush2.bf16.msra.mxu0 0
  %643 = vmatprep.subr.bf16.mxu0 0
  %644 = vmatpush2.bf16.msra.mxu0 0
  %645 = vmatprep.subr.bf16.mxu0 0
  %646 = vmatpush2.bf16.msra.mxu0 0
  %647 = vmatprep.subr.bf16.mxu0 0
  %648 = vmatpush2.bf16.msra.mxu0 0
  %649 = vmatprep.subr.bf16.mxu0 0
  %650 = vmatpush2.bf16.msra.mxu0 0
  %651 = vmatprep.subr.bf16.mxu0 0
  %652 = vmatpush2.bf16.msra.mxu0 0
  %653 = vmatprep.subr.bf16.mxu0 0
  %654 = vmatpush2.bf16.msra.mxu0 0
  %655 = vmatprep.subr.bf16.mxu0 0
  %656 = vmatpush2.bf16.msra.mxu0 0
  %657 = vmatprep.mubr.bf16.mxu0 0
  %658 = vmatmul.mubr.bf16.gmra.mxu0 %v553
  %v659 = vpop.f32.mrf.mxu0
  %v660 = vadd.f32 %v576, %v659
  %v661 = vpop.f32.mrf.mxu0
  %v662 = vpop.f32.mrf.mxu0
  %v663 = vadd.f32 %v576, %v662
  %v664 = vpop.f32.mrf.mxu0
  %665 = vmatprep.mubr.bf16.mxu0 0
  %666 = vmatmul.mubr.bf16.gmra.mxu0 %v554
  %v667 = vpop.f32.mrf.mxu0
  %v668 = vadd.f32 %v576, %v667
  %v669 = vpop.f32.mrf.mxu0
  %v670 = vpop.f32.mrf.mxu0
  %v671 = vadd.f32 %v576, %v670
  %v672 = vpop.f32.mrf.mxu0
  %673 = vmatprep.mubr.bf16.mxu0 0
  %674 = vmatmul.mubr.bf16.gmra.mxu0 %v555
  %v675 = vpop.f32.mrf.mxu0
  %v676 = vadd.f32 %v576, %v675
  %v677 = vpop.f32.mrf.mxu0
  %v678 = vpop.f32.mrf.mxu0
  %v679 = vadd.f32 %v576, %v678
  %v680 = vpop.f32.mrf.mxu0
  %681 = vmatprep.mubr.bf16.mxu0 0
  %682 = vmatmul.mubr.bf16.gmra.mxu0 %v556
  %v683 = vpop.f32.mrf.mxu0
  %v684 = vadd.f32 %v576, %v683
  %v685 = vpop.f32.mrf.mxu0
  %v686 = vpop.f32.mrf.mxu0
  %v687 = vadd.f32 %v576, %v686
  %v688 = vpop.f32.mrf.mxu0
  %689 = vdwg.mxu0
  %v690 = vpack.c.bf16 %v37, %v36
  %s691 = scalar_lea.vmem %s9, 64
  %v692 = vld [vmem:[%s691] sm:$0xf]
  %v693 = vld [vmem:[%s691 + $0x4] sm:$0xf]
  %v694 = vld [vmem:[%s691 + $0x8] sm:$0xf]
  %v695 = vld [vmem:[%s691 + $0xc] sm:$0xf]
  %v696 = vld [vmem:[%s691 + $0x10] sm:$0xf]
  %v697 = vld [vmem:[%s691 + $0x14] sm:$0xf]
  %v698 = vld [vmem:[%s691 + $0x18] sm:$0xf]
  %v699 = vld [vmem:[%s691 + $0x1c] sm:$0xf]
  %v700 = vld [vmem:[%s691 + $0x20] sm:$0xf]
  %v701 = vld [vmem:[%s691 + $0x24] sm:$0xf]
  %v702 = vld [vmem:[%s691 + $0x28] sm:$0xf]
  %v703 = vld [vmem:[%s691 + $0x2c] sm:$0xf]
  %v704 = vld [vmem:[%s691 + $0x30] sm:$0xf]
  %v705 = vld [vmem:[%s691 + $0x34] sm:$0xf]
  %v706 = vld [vmem:[%s691 + $0x38] sm:$0xf]
  %v707 = vld [vmem:[%s691 + $0x3c] sm:$0xf]
  %v708 = vlaneseq
  %v709 = vshrl.u32 %v708, 7
  %v710 = vsub.s32 2, %v709
  %v711 = vrot.slane %v58, %v710
  %v728 = vunpack.c.l.b16 %v692
  %v729 = vunpack.c.l.b16 %v693
  %v730 = vunpack.c.l.b16 %v694
  %v731 = vunpack.c.l.b16 %v695
  %v732 = vunpack.c.l.b16 %v696
  %v733 = vunpack.c.l.b16 %v697
  %v734 = vunpack.c.l.b16 %v698
  %v735 = vunpack.c.l.b16 %v699
  %v736 = vunpack.c.l.b16 %v700
  %v737 = vunpack.c.l.b16 %v701
  %v738 = vunpack.c.l.b16 %v702
  %v739 = vunpack.c.l.b16 %v703
  %v740 = vunpack.c.l.b16 %v704
  %v741 = vunpack.c.l.b16 %v705
  %v742 = vunpack.c.l.b16 %v706
  %v743 = vunpack.c.l.b16 %v707
  %v744 = vpack.c.b16 %v729, %v728
  %v745 = vpack.c.b16 %v731, %v730
  %v746 = vpack.c.b16 %v733, %v732
  %v747 = vpack.c.b16 %v735, %v734
  %v748 = vpack.c.b16 %v737, %v736
  %v749 = vpack.c.b16 %v739, %v738
  %v750 = vpack.c.b16 %v741, %v740
  %v751 = vpack.c.b16 %v743, %v742
  %760 = vmatprep.subr.bf16.mxu0 0
  %761 = vmatpush1.bf16.msra.mxu0 %v751
  %762 = vmatprep.subr.bf16.mxu0 0
  %763 = vmatpush1.bf16.msra.mxu0 %v750
  %764 = vmatprep.subr.bf16.mxu0 0
  %765 = vmatpush1.bf16.msra.mxu0 %v749
  %766 = vmatprep.subr.bf16.mxu0 0
  %767 = vmatpush1.bf16.msra.mxu0 %v748
  %768 = vmatprep.subr.bf16.mxu0 0
  %769 = vmatpush1.bf16.msra.mxu0 %v747
  %770 = vmatprep.subr.bf16.mxu0 0
  %771 = vmatpush1.bf16.msra.mxu0 %v746
  %772 = vmatprep.subr.bf16.mxu0 0
  %773 = vmatpush1.bf16.msra.mxu0 %v745
  %774 = vmatprep.subr.bf16.mxu0 0
  %775 = vmatpush1.bf16.msra.mxu0 %v744
  %776 = vmatprep.subr.bf16.mxu0 0
  %777 = vmatpush2.bf16.msra.mxu0 0
  %778 = vmatprep.subr.bf16.mxu0 0
  %779 = vmatpush2.bf16.msra.mxu0 0
  %780 = vmatprep.subr.bf16.mxu0 0
  %781 = vmatpush2.bf16.msra.mxu0 0
  %782 = vmatprep.subr.bf16.mxu0 0
  %783 = vmatpush2.bf16.msra.mxu0 0
  %784 = vmatprep.subr.bf16.mxu0 0
  %785 = vmatpush2.bf16.msra.mxu0 0
  %786 = vmatprep.subr.bf16.mxu0 0
  %787 = vmatpush2.bf16.msra.mxu0 0
  %788 = vmatprep.subr.bf16.mxu0 0
  %789 = vmatpush2.bf16.msra.mxu0 0
  %790 = vmatprep.subr.bf16.mxu0 0
  %791 = vmatpush2.bf16.msra.mxu0 0
  %792 = vmatprep.mubr.bf16.mxu0 0
  %793 = vmatmul.mubr.bf16.gmra.mxu0 %v690
  %v794 = vpop.f32.mrf.mxu0
  %v795 = vadd.f32 %v711, %v794
  %v796 = vpop.f32.mrf.mxu0
  %v797 = vpop.f32.mrf.mxu0
  %v798 = vadd.f32 %v711, %v797
  %v799 = vpop.f32.mrf.mxu0
  %800 = vdwg.mxu0
  %v801 = vmul.f32 %v795, %v38
  %v802 = vmul.f32 %v798, %v39
  %v803 = vpack.c.bf16 %v802, %v801
  %v820 = vunpack.c.l.b16 %v40
  %v821 = vunpack.c.l.b16 %v41
  %v822 = vunpack.c.l.b16 %v42
  %v823 = vunpack.c.l.b16 %v43
  %v824 = vunpack.c.l.b16 %v44
  %v825 = vunpack.c.l.b16 %v45
  %v826 = vunpack.c.l.b16 %v46
  %v827 = vunpack.c.l.b16 %v47
  %v828 = vunpack.c.l.b16 %v48
  %v829 = vunpack.c.l.b16 %v49
  %v830 = vunpack.c.l.b16 %v50
  %v831 = vunpack.c.l.b16 %v51
  %v832 = vunpack.c.l.b16 %v52
  %v833 = vunpack.c.l.b16 %v53
  %v834 = vunpack.c.l.b16 %v54
  %v835 = vunpack.c.l.b16 %v55
  %v836 = vpack.c.b16 %v821, %v820
  %v837 = vpack.c.b16 %v823, %v822
  %v838 = vpack.c.b16 %v825, %v824
  %v839 = vpack.c.b16 %v827, %v826
  %v840 = vpack.c.b16 %v829, %v828
  %v841 = vpack.c.b16 %v831, %v830
  %v842 = vpack.c.b16 %v833, %v832
  %v843 = vpack.c.b16 %v835, %v834
  %vm844 = vcmask 130048
  %v846 = vsel %vm844, %v836, 0
  %v849 = vsel %vm844, %v837, 0
  %v852 = vsel %vm844, %v838, 0
  %v855 = vsel %vm844, %v839, 0
  %v858 = vsel %vm844, %v840, 0
  %v861 = vsel %vm844, %v841, 0
  %v864 = vsel %vm844, %v842, 0
  %v867 = vsel %vm844, %v843, 0
  %869 = vmatprep.subr.bf16.mxu0 0
  %870 = vmatpush1.bf16.msra.mxu0 0
  %871 = vmatprep.subr.bf16.mxu0 0
  %872 = vmatpush1.bf16.msra.mxu0 0
  %873 = vmatprep.subr.bf16.mxu0 0
  %874 = vmatpush1.bf16.msra.mxu0 0
  %875 = vmatprep.subr.bf16.mxu0 0
  %876 = vmatpush1.bf16.msra.mxu0 0
  %877 = vmatprep.subr.bf16.mxu0 0
  %878 = vmatpush1.bf16.msra.mxu0 0
  %879 = vmatprep.subr.bf16.mxu0 0
  %880 = vmatpush1.bf16.msra.mxu0 0
  %881 = vmatprep.subr.bf16.mxu0 0
  %882 = vmatpush1.bf16.msra.mxu0 0
  %883 = vmatprep.subr.bf16.mxu0 0
  %884 = vmatpush1.bf16.msra.mxu0 %v803
  %885 = vmatprep.subr.bf16.mxu0 0
  %886 = vmatpush2.bf16.msra.mxu0 0
  %887 = vmatprep.subr.bf16.mxu0 0
  %888 = vmatpush2.bf16.msra.mxu0 0
  %889 = vmatprep.subr.bf16.mxu0 0
  %890 = vmatpush2.bf16.msra.mxu0 0
  %891 = vmatprep.subr.bf16.mxu0 0
  %892 = vmatpush2.bf16.msra.mxu0 0
  %893 = vmatprep.subr.bf16.mxu0 0
  %894 = vmatpush2.bf16.msra.mxu0 0
  %895 = vmatprep.subr.bf16.mxu0 0
  %896 = vmatpush2.bf16.msra.mxu0 0
  %897 = vmatprep.subr.bf16.mxu0 0
  %898 = vmatpush2.bf16.msra.mxu0 0
  %899 = vmatprep.subr.bf16.mxu0 0
  %900 = vmatpush2.bf16.msra.mxu0 0
  %901 = vmatprep.mubr.bf16.mxu0 0
  %902 = vmatmul.mubr.bf16.gmra.mxu0 %v846
  %v903 = vpop.f32.mrf.mxu0
  %v904 = vadd.f32 0.0, %v903
  %v905 = vpop.f32.mrf.mxu0
  %v906 = vpop.f32.mrf.mxu0
  %v907 = vadd.f32 0.0, %v906
  %v908 = vpop.f32.mrf.mxu0
  %909 = vmatprep.mubr.bf16.mxu0 0
  %910 = vmatmul.mubr.bf16.gmra.mxu0 %v849
  %v911 = vpop.f32.mrf.mxu0
  %v912 = vadd.f32 0.0, %v911
  %v913 = vpop.f32.mrf.mxu0
  %v914 = vpop.f32.mrf.mxu0
  %v915 = vadd.f32 0.0, %v914
  %v916 = vpop.f32.mrf.mxu0
  %917 = vmatprep.mubr.bf16.mxu0 0
  %918 = vmatmul.mubr.bf16.gmra.mxu0 %v852
  %v919 = vpop.f32.mrf.mxu0
  %v920 = vadd.f32 0.0, %v919
  %v921 = vpop.f32.mrf.mxu0
  %v922 = vpop.f32.mrf.mxu0
  %v923 = vadd.f32 0.0, %v922
  %v924 = vpop.f32.mrf.mxu0
  %925 = vmatprep.mubr.bf16.mxu0 0
  %926 = vmatmul.mubr.bf16.gmra.mxu0 %v855
  %v927 = vpop.f32.mrf.mxu0
  %v928 = vadd.f32 0.0, %v927
  %v929 = vpop.f32.mrf.mxu0
  %v930 = vpop.f32.mrf.mxu0
  %v931 = vadd.f32 0.0, %v930
  %v932 = vpop.f32.mrf.mxu0
  %933 = vmatprep.mubr.bf16.mxu0 0
  %934 = vmatmul.mubr.bf16.gmra.mxu0 %v858
  %v935 = vpop.f32.mrf.mxu0
  %v936 = vadd.f32 0.0, %v935
  %v937 = vpop.f32.mrf.mxu0
  %v938 = vpop.f32.mrf.mxu0
  %v939 = vadd.f32 0.0, %v938
  %v940 = vpop.f32.mrf.mxu0
  %941 = vmatprep.mubr.bf16.mxu0 0
  %942 = vmatmul.mubr.bf16.gmra.mxu0 %v861
  %v943 = vpop.f32.mrf.mxu0
  %v944 = vadd.f32 0.0, %v943
  %v945 = vpop.f32.mrf.mxu0
  %v946 = vpop.f32.mrf.mxu0
  %v947 = vadd.f32 0.0, %v946
  %v948 = vpop.f32.mrf.mxu0
  %949 = vmatprep.mubr.bf16.mxu0 0
  %950 = vmatmul.mubr.bf16.gmra.mxu0 %v864
  %v951 = vpop.f32.mrf.mxu0
  %v952 = vadd.f32 0.0, %v951
  %v953 = vpop.f32.mrf.mxu0
  %v954 = vpop.f32.mrf.mxu0
  %v955 = vadd.f32 0.0, %v954
  %v956 = vpop.f32.mrf.mxu0
  %957 = vmatprep.mubr.bf16.mxu0 0
  %958 = vmatmul.mubr.bf16.gmra.mxu0 %v867
  %v959 = vpop.f32.mrf.mxu0
  %v960 = vadd.f32 0.0, %v959
  %v961 = vpop.f32.mrf.mxu0
  %v962 = vpop.f32.mrf.mxu0
  %v963 = vadd.f32 0.0, %v962
  %v964 = vpop.f32.mrf.mxu0
  %965 = vdwg.mxu0
  %v966 = vmul.f32 %v904, %v660
  %v967 = vmul.f32 %v907, %v663
  %v968 = vmul.f32 %v912, %v668
  %v969 = vmul.f32 %v915, %v671
  %v970 = vmul.f32 %v920, %v676
  %v971 = vmul.f32 %v923, %v679
  %v972 = vmul.f32 %v928, %v684
  %v973 = vmul.f32 %v931, %v687
  %v974 = vmul.f32 %v936, %v660
  %v975 = vmul.f32 %v939, %v663
  %v976 = vmul.f32 %v944, %v668
  %v977 = vmul.f32 %v947, %v671
  %v978 = vmul.f32 %v952, %v676
  %v979 = vmul.f32 %v955, %v679
  %v980 = vmul.f32 %v960, %v684
  %v981 = vmul.f32 %v963, %v687
  %v982 = vpack.c.bf16 %v967, %v966
  %v983 = vpack.c.bf16 %v969, %v968
  %v984 = vpack.c.bf16 %v971, %v970
  %v985 = vpack.c.bf16 %v973, %v972
  %v986 = vpack.c.bf16 %v975, %v974
  %v987 = vpack.c.bf16 %v977, %v976
  %v988 = vpack.c.bf16 %v979, %v978
  %v989 = vpack.c.bf16 %v981, %v980
  %v992 = vunpack.c.l.b16 %v56
  %v993 = vunpack.c.l.b16 %v57
  %v994 = vpack.c.b16 %v993, %v992
  %996 = vmatprep.subr.bf16.mxu0 0
  %997 = vmatpush1.bf16.msra.mxu0 %v989
  %998 = vmatprep.subr.bf16.mxu0 0
  %999 = vmatpush1.bf16.msra.mxu0 %v988
  %1000 = vmatprep.subr.bf16.mxu0 0
  %1001 = vmatpush1.bf16.msra.mxu0 %v987
  %1002 = vmatprep.subr.bf16.mxu0 0
  %1003 = vmatpush1.bf16.msra.mxu0 %v986
  %1004 = vmatprep.subr.bf16.mxu0 0
  %1005 = vmatpush1.bf16.msra.mxu0 %v985
  %1006 = vmatprep.subr.bf16.mxu0 0
  %1007 = vmatpush1.bf16.msra.mxu0 %v984
  %1008 = vmatprep.subr.bf16.mxu0 0
  %1009 = vmatpush1.bf16.msra.mxu0 %v983
  %1010 = vmatprep.subr.bf16.mxu0 0
  %1011 = vmatpush1.bf16.msra.mxu0 %v982
  %1012 = vmatprep.subr.bf16.mxu0 0
  %1013 = vmatpush2.bf16.msra.mxu0 0
  %1014 = vmatprep.subr.bf16.mxu0 0
  %1015 = vmatpush2.bf16.msra.mxu0 0
  %1016 = vmatprep.subr.bf16.mxu0 0
  %1017 = vmatpush2.bf16.msra.mxu0 0
  %1018 = vmatprep.subr.bf16.mxu0 0
  %1019 = vmatpush2.bf16.msra.mxu0 0
  %1020 = vmatprep.subr.bf16.mxu0 0
  %1021 = vmatpush2.bf16.msra.mxu0 0
  %1022 = vmatprep.subr.bf16.mxu0 0
  %1023 = vmatpush2.bf16.msra.mxu0 0
  %1024 = vmatprep.subr.bf16.mxu0 0
  %1025 = vmatpush2.bf16.msra.mxu0 0
  %1026 = vmatprep.subr.bf16.mxu0 0
  %1027 = vmatpush2.bf16.msra.mxu0 0
  %1028 = vmatprep.mubr.bf16.mxu0 0
  %1029 = vmatmul.mubr.bf16.gmra.mxu0 %v994
  %v1030 = vpop.f32.mrf.mxu0
  %v1031 = vadd.f32 0.0, %v1030
  %v1032 = vpop.f32.mrf.mxu0
  %v1033 = vpop.f32.mrf.mxu0
  %v1034 = vadd.f32 0.0, %v1033
  %v1035 = vpop.f32.mrf.mxu0
  %1036 = vdwg.mxu0
  %v1037 = vpack.c.bf16 %v1034, %v1031
  %s1038 = scalar_lea.vmem %s9, 128
  %v1039 = vld [vmem:[%s1038] sm:$0xf]
  %v1040 = vld [vmem:[%s1038 + $0x4] sm:$0xf]
  %v1041 = vld [vmem:[%s1038 + $0x8] sm:$0xf]
  %v1042 = vld [vmem:[%s1038 + $0xc] sm:$0xf]
  %v1043 = vld [vmem:[%s1038 + $0x10] sm:$0xf]
  %v1044 = vld [vmem:[%s1038 + $0x14] sm:$0xf]
  %v1045 = vld [vmem:[%s1038 + $0x18] sm:$0xf]
  %v1046 = vld [vmem:[%s1038 + $0x1c] sm:$0xf]
  %v1047 = vld [vmem:[%s1038 + $0x20] sm:$0xf]
  %v1048 = vld [vmem:[%s1038 + $0x24] sm:$0xf]
  %v1049 = vld [vmem:[%s1038 + $0x28] sm:$0xf]
  %v1050 = vld [vmem:[%s1038 + $0x2c] sm:$0xf]
  %v1051 = vld [vmem:[%s1038 + $0x30] sm:$0xf]
  %v1052 = vld [vmem:[%s1038 + $0x34] sm:$0xf]
  %v1053 = vld [vmem:[%s1038 + $0x38] sm:$0xf]
  %v1054 = vld [vmem:[%s1038 + $0x3c] sm:$0xf]
  %v1055 = vlaneseq
  %v1056 = vshrl.u32 %v1055, 7
  %v1057 = vsub.s32 3, %v1056
  %v1058 = vrot.slane %v58, %v1057
  %v1075 = vunpack.c.l.b16 %v1039
  %v1076 = vunpack.c.l.b16 %v1040
  %v1077 = vunpack.c.l.b16 %v1041
  %v1078 = vunpack.c.l.b16 %v1042
  %v1079 = vunpack.c.l.b16 %v1043
  %v1080 = vunpack.c.l.b16 %v1044
  %v1081 = vunpack.c.l.b16 %v1045
  %v1082 = vunpack.c.l.b16 %v1046
  %v1083 = vunpack.c.l.b16 %v1047
  %v1084 = vunpack.c.l.b16 %v1048
  %v1085 = vunpack.c.l.b16 %v1049
  %v1086 = vunpack.c.l.b16 %v1050
  %v1087 = vunpack.c.l.b16 %v1051
  %v1088 = vunpack.c.l.b16 %v1052
  %v1089 = vunpack.c.l.b16 %v1053
  %v1090 = vunpack.c.l.b16 %v1054
  %v1091 = vpack.c.b16 %v1076, %v1075
  %v1092 = vpack.c.b16 %v1078, %v1077
  %v1093 = vpack.c.b16 %v1080, %v1079
  %v1094 = vpack.c.b16 %v1082, %v1081
  %v1095 = vpack.c.b16 %v1084, %v1083
  %v1096 = vpack.c.b16 %v1086, %v1085
  %v1097 = vpack.c.b16 %v1088, %v1087
  %v1098 = vpack.c.b16 %v1090, %v1089
  %1107 = vmatprep.subr.bf16.mxu0 0
  %1108 = vmatpush1.bf16.msra.mxu0 %v1098
  %1109 = vmatprep.subr.bf16.mxu0 0
  %1110 = vmatpush1.bf16.msra.mxu0 %v1097
  %1111 = vmatprep.subr.bf16.mxu0 0
  %1112 = vmatpush1.bf16.msra.mxu0 %v1096
  %1113 = vmatprep.subr.bf16.mxu0 0
  %1114 = vmatpush1.bf16.msra.mxu0 %v1095
  %1115 = vmatprep.subr.bf16.mxu0 0
  %1116 = vmatpush1.bf16.msra.mxu0 %v1094
  %1117 = vmatprep.subr.bf16.mxu0 0
  %1118 = vmatpush1.bf16.msra.mxu0 %v1093
  %1119 = vmatprep.subr.bf16.mxu0 0
  %1120 = vmatpush1.bf16.msra.mxu0 %v1092
  %1121 = vmatprep.subr.bf16.mxu0 0
  %1122 = vmatpush1.bf16.msra.mxu0 %v1091
  %1123 = vmatprep.subr.bf16.mxu0 0
  %1124 = vmatpush2.bf16.msra.mxu0 0
  %1125 = vmatprep.subr.bf16.mxu0 0
  %1126 = vmatpush2.bf16.msra.mxu0 0
  %1127 = vmatprep.subr.bf16.mxu0 0
  %1128 = vmatpush2.bf16.msra.mxu0 0
  %1129 = vmatprep.subr.bf16.mxu0 0
  %1130 = vmatpush2.bf16.msra.mxu0 0
  %1131 = vmatprep.subr.bf16.mxu0 0
  %1132 = vmatpush2.bf16.msra.mxu0 0
  %1133 = vmatprep.subr.bf16.mxu0 0
  %1134 = vmatpush2.bf16.msra.mxu0 0
  %1135 = vmatprep.subr.bf16.mxu0 0
  %1136 = vmatpush2.bf16.msra.mxu0 0
  %1137 = vmatprep.subr.bf16.mxu0 0
  %1138 = vmatpush2.bf16.msra.mxu0 0
  %1139 = vmatprep.mubr.bf16.mxu0 0
  %1140 = vmatmul.mubr.bf16.gmra.mxu0 %v1037
  %v1141 = vpop.f32.mrf.mxu0
  %v1142 = vadd.f32 %v1058, %v1141
  %v1143 = vpop.f32.mrf.mxu0
  %v1144 = vpop.f32.mrf.mxu0
  %v1145 = vadd.f32 %v1058, %v1144
  %v1146 = vpop.f32.mrf.mxu0
  %1147 = vdwg.mxu0
  %v1148 = vmax.f32 %v1142, 0.0
  %v1149 = vmax.f32 %v1145, 0.0
  %v1150 = vand.u32 2147483647, %v1142
  %v1151 = vand.u32 2147483647, %v1145
  %v1152 = vsub.f32 0.0, %v1150
  %v1153 = vsub.f32 0.0, %v1151
  %v1154 = vmul.f32 %v1152, 1.442695
  %v1155 = vpow.pop %v1154
  %v1156 = vmul.f32 %v1153, 1.442695
  %v1157 = vpow.pop %v1156
  %v1158 = vadd.f32 %v1155, 1.0
  %v1159 = vlog2.pop %v1158
  %v1160 = vmul.f32 %v1159, 0.6931472
  %v1161 = vmul.f32 -0.5, %v1155
  %v1162 = vadd.f32 %v1161, 1.0
  %v1163 = vmul.f32 %v1162, %v1155
  %v1164 = vand.u32 2147483647, %v1155
  %vm1165 = vcmp.lt.f32.partialorder %v1164, 0.0004427343
  %v1166 = vsel %vm1165, %v1163, %v1160
  %v1167 = vadd.f32 %v1157, 1.0
  %v1168 = vlog2.pop %v1167
  %v1169 = vmul.f32 %v1168, 0.6931472
  %v1170 = vmul.f32 -0.5, %v1157
  %v1171 = vadd.f32 %v1170, 1.0
  %v1172 = vmul.f32 %v1171, %v1157
  %v1173 = vand.u32 2147483647, %v1157
  %vm1174 = vcmp.lt.f32.partialorder %v1173, 0.0004427343
  %v1175 = vsel %vm1174, %v1172, %v1169
  %v1176 = vadd.f32 %v1148, %v1166
  %v1177 = vadd.f32 %v1149, %v1175
  %v1178 = vsub.f32 %v1176, 0.6931472
  %v1179 = vsub.f32 %v1177, 0.6931472
  %v1180 = vpack.c.bf16 %v1179, %v1178
  %s1181 = scalar_lea.vmem %s9, 192
  %v1182 = vld [vmem:[%s1181] sm:$0xf]
  %v1183 = vld [vmem:[%s1181 + $0x4] sm:$0xf]
  %v1184 = vld [vmem:[%s1181 + $0x8] sm:$0xf]
  %v1185 = vld [vmem:[%s1181 + $0xc] sm:$0xf]
  %v1186 = vld [vmem:[%s1181 + $0x10] sm:$0xf]
  %v1187 = vld [vmem:[%s1181 + $0x14] sm:$0xf]
  %v1188 = vld [vmem:[%s1181 + $0x18] sm:$0xf]
  %v1189 = vld [vmem:[%s1181 + $0x1c] sm:$0xf]
  %v1190 = vld [vmem:[%s1181 + $0x20] sm:$0xf]
  %v1191 = vld [vmem:[%s1181 + $0x24] sm:$0xf]
  %v1192 = vld [vmem:[%s1181 + $0x28] sm:$0xf]
  %v1193 = vld [vmem:[%s1181 + $0x2c] sm:$0xf]
  %v1194 = vld [vmem:[%s1181 + $0x30] sm:$0xf]
  %v1195 = vld [vmem:[%s1181 + $0x34] sm:$0xf]
  %v1196 = vld [vmem:[%s1181 + $0x38] sm:$0xf]
  %v1197 = vld [vmem:[%s1181 + $0x3c] sm:$0xf]
  %v1214 = vunpack.c.l.b16 %v1182
  %v1215 = vunpack.c.l.b16 %v1183
  %v1216 = vunpack.c.l.b16 %v1184
  %v1217 = vunpack.c.l.b16 %v1185
  %v1218 = vunpack.c.l.b16 %v1186
  %v1219 = vunpack.c.l.b16 %v1187
  %v1220 = vunpack.c.l.b16 %v1188
  %v1221 = vunpack.c.l.b16 %v1189
  %v1222 = vunpack.c.l.b16 %v1190
  %v1223 = vunpack.c.l.b16 %v1191
  %v1224 = vunpack.c.l.b16 %v1192
  %v1225 = vunpack.c.l.b16 %v1193
  %v1226 = vunpack.c.l.b16 %v1194
  %v1227 = vunpack.c.l.b16 %v1195
  %v1228 = vunpack.c.l.b16 %v1196
  %v1229 = vunpack.c.l.b16 %v1197
  %v1230 = vpack.c.b16 %v1215, %v1214
  %v1231 = vpack.c.b16 %v1217, %v1216
  %v1232 = vpack.c.b16 %v1219, %v1218
  %v1233 = vpack.c.b16 %v1221, %v1220
  %v1234 = vpack.c.b16 %v1223, %v1222
  %v1235 = vpack.c.b16 %v1225, %v1224
  %v1236 = vpack.c.b16 %v1227, %v1226
  %v1237 = vpack.c.b16 %v1229, %v1228
  %1246 = vmatprep.subr.bf16.mxu0 0
  %1247 = vmatpush1.bf16.msra.mxu0 %v1237
  %1248 = vmatprep.subr.bf16.mxu0 0
  %1249 = vmatpush1.bf16.msra.mxu0 %v1236
  %1250 = vmatprep.subr.bf16.mxu0 0
  %1251 = vmatpush1.bf16.msra.mxu0 %v1235
  %1252 = vmatprep.subr.bf16.mxu0 0
  %1253 = vmatpush1.bf16.msra.mxu0 %v1234
  %1254 = vmatprep.subr.bf16.mxu0 0
  %1255 = vmatpush1.bf16.msra.mxu0 %v1233
  %1256 = vmatprep.subr.bf16.mxu0 0
  %1257 = vmatpush1.bf16.msra.mxu0 %v1232
  %1258 = vmatprep.subr.bf16.mxu0 0
  %1259 = vmatpush1.bf16.msra.mxu0 %v1231
  %1260 = vmatprep.subr.bf16.mxu0 0
  %1261 = vmatpush1.bf16.msra.mxu0 %v1230
  %1262 = vmatprep.subr.bf16.mxu0 0
  %1263 = vmatpush2.bf16.msra.mxu0 0
  %1264 = vmatprep.subr.bf16.mxu0 0
  %1265 = vmatpush2.bf16.msra.mxu0 0
  %1266 = vmatprep.subr.bf16.mxu0 0
  %1267 = vmatpush2.bf16.msra.mxu0 0
  %1268 = vmatprep.subr.bf16.mxu0 0
  %1269 = vmatpush2.bf16.msra.mxu0 0
  %1270 = vmatprep.subr.bf16.mxu0 0
  %1271 = vmatpush2.bf16.msra.mxu0 0
  %1272 = vmatprep.subr.bf16.mxu0 0
  %1273 = vmatpush2.bf16.msra.mxu0 0
  %1274 = vmatprep.subr.bf16.mxu0 0
  %1275 = vmatpush2.bf16.msra.mxu0 0
  %1276 = vmatprep.subr.bf16.mxu0 0
  %1277 = vmatpush2.bf16.msra.mxu0 0
  %1278 = vmatprep.mubr.bf16.mxu0 0
  %1279 = vmatmul.mubr.bf16.gmra.mxu0 %v1180
  %v1280 = vpop.f32.mrf.mxu0
  %v1281 = vadd.f32 0.0, %v1280
  %v1282 = vpop.f32.mrf.mxu0
  %v1283 = vpop.f32.mrf.mxu0
  %v1284 = vadd.f32 0.0, %v1283
  %v1285 = vpop.f32.mrf.mxu0
  %1286 = vdwg.mxu0
  %v1287 = vadd.f32 %v36, %v1281
  %v1288 = vadd.f32 %v37, %v1284
  %v1289 = vlaneseq
  %v1290 = vshrl.u32 %v1289, 7
  %v1291 = vsub.s32 4, %v1290
  %v1292 = vrot.slane %v58, %v1291
  %v1293 = vadd.f32 %v1287, %v1292
  %v1294 = vadd.f32 %v1288, %v1292
  %v1295 = vpack.c.bf16 %v540, %v538
  %v1296 = vpack.c.bf16 %v544, %v542
  %v1297 = vpack.c.bf16 %v548, %v546
  %v1298 = vpack.c.bf16 %v552, %v550
  %s1299 = scalar_lea.vmem %s9, 256
  %v1300 = vld [vmem:[%s1299] sm:$0xf]
  %v1301 = vld [vmem:[%s1299 + $0x4] sm:$0xf]
  %v1302 = vld [vmem:[%s1299 + $0x8] sm:$0xf]
  %v1303 = vld [vmem:[%s1299 + $0xc] sm:$0xf]
  %v1304 = vld [vmem:[%s1299 + $0x10] sm:$0xf]
  %v1305 = vld [vmem:[%s1299 + $0x14] sm:$0xf]
  %v1306 = vld [vmem:[%s1299 + $0x18] sm:$0xf]
  %v1307 = vld [vmem:[%s1299 + $0x1c] sm:$0xf]
  %v1308 = vld [vmem:[%s1299 + $0x20] sm:$0xf]
  %v1309 = vld [vmem:[%s1299 + $0x24] sm:$0xf]
  %v1310 = vld [vmem:[%s1299 + $0x28] sm:$0xf]
  %v1311 = vld [vmem:[%s1299 + $0x2c] sm:$0xf]
  %v1312 = vld [vmem:[%s1299 + $0x30] sm:$0xf]
  %v1313 = vld [vmem:[%s1299 + $0x34] sm:$0xf]
  %v1314 = vld [vmem:[%s1299 + $0x38] sm:$0xf]
  %v1315 = vld [vmem:[%s1299 + $0x3c] sm:$0xf]
  %v1316 = vlaneseq
  %v1317 = vshrl.u32 %v1316, 7
  %v1318 = vsub.s32 5, %v1317
  %v1319 = vrot.slane %v58, %v1318
  %v1336 = vunpack.c.l.b16 %v1300
  %v1337 = vunpack.c.l.b16 %v1301
  %v1338 = vunpack.c.l.b16 %v1302
  %v1339 = vunpack.c.l.b16 %v1303
  %v1340 = vunpack.c.l.b16 %v1304
  %v1341 = vunpack.c.l.b16 %v1305
  %v1342 = vunpack.c.l.b16 %v1306
  %v1343 = vunpack.c.l.b16 %v1307
  %v1344 = vunpack.c.l.b16 %v1308
  %v1345 = vunpack.c.l.b16 %v1309
  %v1346 = vunpack.c.l.b16 %v1310
  %v1347 = vunpack.c.l.b16 %v1311
  %v1348 = vunpack.c.l.b16 %v1312
  %v1349 = vunpack.c.l.b16 %v1313
  %v1350 = vunpack.c.l.b16 %v1314
  %v1351 = vunpack.c.l.b16 %v1315
  %v1352 = vpack.c.b16 %v1337, %v1336
  %v1353 = vpack.c.b16 %v1339, %v1338
  %v1354 = vpack.c.b16 %v1341, %v1340
  %v1355 = vpack.c.b16 %v1343, %v1342
  %v1356 = vpack.c.b16 %v1345, %v1344
  %v1357 = vpack.c.b16 %v1347, %v1346
  %v1358 = vpack.c.b16 %v1349, %v1348
  %v1359 = vpack.c.b16 %v1351, %v1350
  %1368 = vmatprep.subr.bf16.mxu0 0
  %1369 = vmatpush1.bf16.msra.mxu0 %v1359
  %1370 = vmatprep.subr.bf16.mxu0 0
  %1371 = vmatpush1.bf16.msra.mxu0 %v1358
  %1372 = vmatprep.subr.bf16.mxu0 0
  %1373 = vmatpush1.bf16.msra.mxu0 %v1357
  %1374 = vmatprep.subr.bf16.mxu0 0
  %1375 = vmatpush1.bf16.msra.mxu0 %v1356
  %1376 = vmatprep.subr.bf16.mxu0 0
  %1377 = vmatpush1.bf16.msra.mxu0 %v1355
  %1378 = vmatprep.subr.bf16.mxu0 0
  %1379 = vmatpush1.bf16.msra.mxu0 %v1354
  %1380 = vmatprep.subr.bf16.mxu0 0
  %1381 = vmatpush1.bf16.msra.mxu0 %v1353
  %1382 = vmatprep.subr.bf16.mxu0 0
  %1383 = vmatpush1.bf16.msra.mxu0 %v1352
  %1384 = vmatprep.subr.bf16.mxu0 0
  %1385 = vmatpush2.bf16.msra.mxu0 0
  %1386 = vmatprep.subr.bf16.mxu0 0
  %1387 = vmatpush2.bf16.msra.mxu0 0
  %1388 = vmatprep.subr.bf16.mxu0 0
  %1389 = vmatpush2.bf16.msra.mxu0 0
  %1390 = vmatprep.subr.bf16.mxu0 0
  %1391 = vmatpush2.bf16.msra.mxu0 0
  %1392 = vmatprep.subr.bf16.mxu0 0
  %1393 = vmatpush2.bf16.msra.mxu0 0
  %1394 = vmatprep.subr.bf16.mxu0 0
  %1395 = vmatpush2.bf16.msra.mxu0 0
  %1396 = vmatprep.subr.bf16.mxu0 0
  %1397 = vmatpush2.bf16.msra.mxu0 0
  %1398 = vmatprep.subr.bf16.mxu0 0
  %1399 = vmatpush2.bf16.msra.mxu0 0
  %1400 = vmatprep.mubr.bf16.mxu0 0
  %1401 = vmatmul.mubr.bf16.gmra.mxu0 %v1295
  %v1402 = vpop.f32.mrf.mxu0
  %v1403 = vadd.f32 %v1319, %v1402
  %v1404 = vpop.f32.mrf.mxu0
  %v1405 = vpop.f32.mrf.mxu0
  %v1406 = vadd.f32 %v1319, %v1405
  %v1407 = vpop.f32.mrf.mxu0
  %1408 = vmatprep.mubr.bf16.mxu0 0
  %1409 = vmatmul.mubr.bf16.gmra.mxu0 %v1296
  %v1410 = vpop.f32.mrf.mxu0
  %v1411 = vadd.f32 %v1319, %v1410
  %v1412 = vpop.f32.mrf.mxu0
  %v1413 = vpop.f32.mrf.mxu0
  %v1414 = vadd.f32 %v1319, %v1413
  %v1415 = vpop.f32.mrf.mxu0
  %1416 = vmatprep.mubr.bf16.mxu0 0
  %1417 = vmatmul.mubr.bf16.gmra.mxu0 %v1297
  %v1418 = vpop.f32.mrf.mxu0
  %v1419 = vadd.f32 %v1319, %v1418
  %v1420 = vpop.f32.mrf.mxu0
  %v1421 = vpop.f32.mrf.mxu0
  %v1422 = vadd.f32 %v1319, %v1421
  %v1423 = vpop.f32.mrf.mxu0
  %1424 = vmatprep.mubr.bf16.mxu0 0
  %1425 = vmatmul.mubr.bf16.gmra.mxu0 %v1298
  %v1426 = vpop.f32.mrf.mxu0
  %v1427 = vadd.f32 %v1319, %v1426
  %v1428 = vpop.f32.mrf.mxu0
  %v1429 = vpop.f32.mrf.mxu0
  %v1430 = vadd.f32 %v1319, %v1429
  %v1431 = vpop.f32.mrf.mxu0
  %1432 = vdwg.mxu0
  %v1433 = vpack.c.bf16 %v1294, %v1293
  %s1434 = scalar_lea.vmem %s9, 320
  %v1435 = vld [vmem:[%s1434] sm:$0xf]
  %v1436 = vld [vmem:[%s1434 + $0x4] sm:$0xf]
  %v1437 = vld [vmem:[%s1434 + $0x8] sm:$0xf]
  %v1438 = vld [vmem:[%s1434 + $0xc] sm:$0xf]
  %v1439 = vld [vmem:[%s1434 + $0x10] sm:$0xf]
  %v1440 = vld [vmem:[%s1434 + $0x14] sm:$0xf]
  %v1441 = vld [vmem:[%s1434 + $0x18] sm:$0xf]
  %v1442 = vld [vmem:[%s1434 + $0x1c] sm:$0xf]
  %v1443 = vld [vmem:[%s1434 + $0x20] sm:$0xf]
  %v1444 = vld [vmem:[%s1434 + $0x24] sm:$0xf]
  %v1445 = vld [vmem:[%s1434 + $0x28] sm:$0xf]
  %v1446 = vld [vmem:[%s1434 + $0x2c] sm:$0xf]
  %v1447 = vld [vmem:[%s1434 + $0x30] sm:$0xf]
  %v1448 = vld [vmem:[%s1434 + $0x34] sm:$0xf]
  %v1449 = vld [vmem:[%s1434 + $0x38] sm:$0xf]
  %v1450 = vld [vmem:[%s1434 + $0x3c] sm:$0xf]
  %v1451 = vlaneseq
  %v1452 = vshrl.u32 %v1451, 7
  %v1453 = vsub.s32 6, %v1452
  %v1454 = vrot.slane %v58, %v1453
  %v1471 = vunpack.c.l.b16 %v1435
  %v1472 = vunpack.c.l.b16 %v1436
  %v1473 = vunpack.c.l.b16 %v1437
  %v1474 = vunpack.c.l.b16 %v1438
  %v1475 = vunpack.c.l.b16 %v1439
  %v1476 = vunpack.c.l.b16 %v1440
  %v1477 = vunpack.c.l.b16 %v1441
  %v1478 = vunpack.c.l.b16 %v1442
  %v1479 = vunpack.c.l.b16 %v1443
  %v1480 = vunpack.c.l.b16 %v1444
  %v1481 = vunpack.c.l.b16 %v1445
  %v1482 = vunpack.c.l.b16 %v1446
  %v1483 = vunpack.c.l.b16 %v1447
  %v1484 = vunpack.c.l.b16 %v1448
  %v1485 = vunpack.c.l.b16 %v1449
  %v1486 = vunpack.c.l.b16 %v1450
  %v1487 = vpack.c.b16 %v1472, %v1471
  %v1488 = vpack.c.b16 %v1474, %v1473
  %v1489 = vpack.c.b16 %v1476, %v1475
  %v1490 = vpack.c.b16 %v1478, %v1477
  %v1491 = vpack.c.b16 %v1480, %v1479
  %v1492 = vpack.c.b16 %v1482, %v1481
  %v1493 = vpack.c.b16 %v1484, %v1483
  %v1494 = vpack.c.b16 %v1486, %v1485
  %1503 = vmatprep.subr.bf16.mxu0 0
  %1504 = vmatpush1.bf16.msra.mxu0 %v1494
  %1505 = vmatprep.subr.bf16.mxu0 0
  %1506 = vmatpush1.bf16.msra.mxu0 %v1493
  %1507 = vmatprep.subr.bf16.mxu0 0
  %1508 = vmatpush1.bf16.msra.mxu0 %v1492
  %1509 = vmatprep.subr.bf16.mxu0 0
  %1510 = vmatpush1.bf16.msra.mxu0 %v1491
  %1511 = vmatprep.subr.bf16.mxu0 0
  %1512 = vmatpush1.bf16.msra.mxu0 %v1490
  %1513 = vmatprep.subr.bf16.mxu0 0
  %1514 = vmatpush1.bf16.msra.mxu0 %v1489
  %1515 = vmatprep.subr.bf16.mxu0 0
  %1516 = vmatpush1.bf16.msra.mxu0 %v1488
  %1517 = vmatprep.subr.bf16.mxu0 0
  %1518 = vmatpush1.bf16.msra.mxu0 %v1487
  %1519 = vmatprep.subr.bf16.mxu0 0
  %1520 = vmatpush2.bf16.msra.mxu0 0
  %1521 = vmatprep.subr.bf16.mxu0 0
  %1522 = vmatpush2.bf16.msra.mxu0 0
  %1523 = vmatprep.subr.bf16.mxu0 0
  %1524 = vmatpush2.bf16.msra.mxu0 0
  %1525 = vmatprep.subr.bf16.mxu0 0
  %1526 = vmatpush2.bf16.msra.mxu0 0
  %1527 = vmatprep.subr.bf16.mxu0 0
  %1528 = vmatpush2.bf16.msra.mxu0 0
  %1529 = vmatprep.subr.bf16.mxu0 0
  %1530 = vmatpush2.bf16.msra.mxu0 0
  %1531 = vmatprep.subr.bf16.mxu0 0
  %1532 = vmatpush2.bf16.msra.mxu0 0
  %1533 = vmatprep.subr.bf16.mxu0 0
  %1534 = vmatpush2.bf16.msra.mxu0 0
  %1535 = vmatprep.mubr.bf16.mxu0 0
  %1536 = vmatmul.mubr.bf16.gmra.mxu0 %v1433
  %v1537 = vpop.f32.mrf.mxu0
  %v1538 = vadd.f32 %v1454, %v1537
  %v1539 = vpop.f32.mrf.mxu0
  %v1540 = vpop.f32.mrf.mxu0
  %v1541 = vadd.f32 %v1454, %v1540
  %v1542 = vpop.f32.mrf.mxu0
  %1543 = vdwg.mxu0
  %v1544 = vmul.f32 %v1538, %v38
  %v1545 = vmul.f32 %v1541, %v39
  %v1546 = vpack.c.bf16 %v1545, %v1544
  %1547 = vmatprep.subr.bf16.mxu0 0
  %1548 = vmatpush1.bf16.msra.mxu0 0
  %1549 = vmatprep.subr.bf16.mxu0 0
  %1550 = vmatpush1.bf16.msra.mxu0 0
  %1551 = vmatprep.subr.bf16.mxu0 0
  %1552 = vmatpush1.bf16.msra.mxu0 0
  %1553 = vmatprep.subr.bf16.mxu0 0
  %1554 = vmatpush1.bf16.msra.mxu0 0
  %1555 = vmatprep.subr.bf16.mxu0 0
  %1556 = vmatpush1.bf16.msra.mxu0 0
  %1557 = vmatprep.subr.bf16.mxu0 0
  %1558 = vmatpush1.bf16.msra.mxu0 0
  %1559 = vmatprep.subr.bf16.mxu0 0
  %1560 = vmatpush1.bf16.msra.mxu0 0
  %1561 = vmatprep.subr.bf16.mxu0 0
  %1562 = vmatpush1.bf16.msra.mxu0 %v1546
  %1563 = vmatprep.subr.bf16.mxu0 0
  %1564 = vmatpush2.bf16.msra.mxu0 0
  %1565 = vmatprep.subr.bf16.mxu0 0
  %1566 = vmatpush2.bf16.msra.mxu0 0
  %1567 = vmatprep.subr.bf16.mxu0 0
  %1568 = vmatpush2.bf16.msra.mxu0 0
  %1569 = vmatprep.subr.bf16.mxu0 0
  %1570 = vmatpush2.bf16.msra.mxu0 0
  %1571 = vmatprep.subr.bf16.mxu0 0
  %1572 = vmatpush2.bf16.msra.mxu0 0
  %1573 = vmatprep.subr.bf16.mxu0 0
  %1574 = vmatpush2.bf16.msra.mxu0 0
  %1575 = vmatprep.subr.bf16.mxu0 0
  %1576 = vmatpush2.bf16.msra.mxu0 0
  %1577 = vmatprep.subr.bf16.mxu0 0
  %1578 = vmatpush2.bf16.msra.mxu0 0
  %1579 = vmatprep.mubr.bf16.mxu0 0
  %1580 = vmatmul.mubr.bf16.gmra.mxu0 %v846
  %v1581 = vpop.f32.mrf.mxu0
  %v1582 = vadd.f32 0.0, %v1581
  %v1583 = vpop.f32.mrf.mxu0
  %v1584 = vpop.f32.mrf.mxu0
  %v1585 = vadd.f32 0.0, %v1584
  %v1586 = vpop.f32.mrf.mxu0
  %1587 = vmatprep.mubr.bf16.mxu0 0
  %1588 = vmatmul.mubr.bf16.gmra.mxu0 %v849
  %v1589 = vpop.f32.mrf.mxu0
  %v1590 = vadd.f32 0.0, %v1589
  %v1591 = vpop.f32.mrf.mxu0
  %v1592 = vpop.f32.mrf.mxu0
  %v1593 = vadd.f32 0.0, %v1592
  %v1594 = vpop.f32.mrf.mxu0
  %1595 = vmatprep.mubr.bf16.mxu0 0
  %1596 = vmatmul.mubr.bf16.gmra.mxu0 %v852
  %v1597 = vpop.f32.mrf.mxu0
  %v1598 = vadd.f32 0.0, %v1597
  %v1599 = vpop.f32.mrf.mxu0
  %v1600 = vpop.f32.mrf.mxu0
  %v1601 = vadd.f32 0.0, %v1600
  %v1602 = vpop.f32.mrf.mxu0
  %1603 = vmatprep.mubr.bf16.mxu0 0
  %1604 = vmatmul.mubr.bf16.gmra.mxu0 %v855
  %v1605 = vpop.f32.mrf.mxu0
  %v1606 = vadd.f32 0.0, %v1605
  %v1607 = vpop.f32.mrf.mxu0
  %v1608 = vpop.f32.mrf.mxu0
  %v1609 = vadd.f32 0.0, %v1608
  %v1610 = vpop.f32.mrf.mxu0
  %1611 = vmatprep.mubr.bf16.mxu0 0
  %1612 = vmatmul.mubr.bf16.gmra.mxu0 %v858
  %v1613 = vpop.f32.mrf.mxu0
  %v1614 = vadd.f32 0.0, %v1613
  %v1615 = vpop.f32.mrf.mxu0
  %v1616 = vpop.f32.mrf.mxu0
  %v1617 = vadd.f32 0.0, %v1616
  %v1618 = vpop.f32.mrf.mxu0
  %1619 = vmatprep.mubr.bf16.mxu0 0
  %1620 = vmatmul.mubr.bf16.gmra.mxu0 %v861
  %v1621 = vpop.f32.mrf.mxu0
  %v1622 = vadd.f32 0.0, %v1621
  %v1623 = vpop.f32.mrf.mxu0
  %v1624 = vpop.f32.mrf.mxu0
  %v1625 = vadd.f32 0.0, %v1624
  %v1626 = vpop.f32.mrf.mxu0
  %1627 = vmatprep.mubr.bf16.mxu0 0
  %1628 = vmatmul.mubr.bf16.gmra.mxu0 %v864
  %v1629 = vpop.f32.mrf.mxu0
  %v1630 = vadd.f32 0.0, %v1629
  %v1631 = vpop.f32.mrf.mxu0
  %v1632 = vpop.f32.mrf.mxu0
  %v1633 = vadd.f32 0.0, %v1632
  %v1634 = vpop.f32.mrf.mxu0
  %1635 = vmatprep.mubr.bf16.mxu0 0
  %1636 = vmatmul.mubr.bf16.gmra.mxu0 %v867
  %v1637 = vpop.f32.mrf.mxu0
  %v1638 = vadd.f32 0.0, %v1637
  %v1639 = vpop.f32.mrf.mxu0
  %v1640 = vpop.f32.mrf.mxu0
  %v1641 = vadd.f32 0.0, %v1640
  %v1642 = vpop.f32.mrf.mxu0
  %1643 = vdwg.mxu0
  %v1644 = vmul.f32 %v1582, %v1403
  %v1645 = vmul.f32 %v1585, %v1406
  %v1646 = vmul.f32 %v1590, %v1411
  %v1647 = vmul.f32 %v1593, %v1414
  %v1648 = vmul.f32 %v1598, %v1419
  %v1649 = vmul.f32 %v1601, %v1422
  %v1650 = vmul.f32 %v1606, %v1427
  %v1651 = vmul.f32 %v1609, %v1430
  %v1652 = vmul.f32 %v1614, %v1403
  %v1653 = vmul.f32 %v1617, %v1406
  %v1654 = vmul.f32 %v1622, %v1411
  %v1655 = vmul.f32 %v1625, %v1414
  %v1656 = vmul.f32 %v1630, %v1419
  %v1657 = vmul.f32 %v1633, %v1422
  %v1658 = vmul.f32 %v1638, %v1427
  %v1659 = vmul.f32 %v1641, %v1430
  %v1660 = vpack.c.bf16 %v1645, %v1644
  %v1661 = vpack.c.bf16 %v1647, %v1646
  %v1662 = vpack.c.bf16 %v1649, %v1648
  %v1663 = vpack.c.bf16 %v1651, %v1650
  %v1664 = vpack.c.bf16 %v1653, %v1652
  %v1665 = vpack.c.bf16 %v1655, %v1654
  %v1666 = vpack.c.bf16 %v1657, %v1656
  %v1667 = vpack.c.bf16 %v1659, %v1658
  %1668 = vmatprep.subr.bf16.mxu0 0
  %1669 = vmatpush1.bf16.msra.mxu0 %v1667
  %1670 = vmatprep.subr.bf16.mxu0 0
  %1671 = vmatpush1.bf16.msra.mxu0 %v1666
  %1672 = vmatprep.subr.bf16.mxu0 0
  %1673 = vmatpush1.bf16.msra.mxu0 %v1665
  %1674 = vmatprep.subr.bf16.mxu0 0
  %1675 = vmatpush1.bf16.msra.mxu0 %v1664
  %1676 = vmatprep.subr.bf16.mxu0 0
  %1677 = vmatpush1.bf16.msra.mxu0 %v1663
  %1678 = vmatprep.subr.bf16.mxu0 0
  %1679 = vmatpush1.bf16.msra.mxu0 %v1662
  %1680 = vmatprep.subr.bf16.mxu0 0
  %1681 = vmatpush1.bf16.msra.mxu0 %v1661
  %1682 = vmatprep.subr.bf16.mxu0 0
  %1683 = vmatpush1.bf16.msra.mxu0 %v1660
  %1684 = vmatprep.subr.bf16.mxu0 0
  %1685 = vmatpush2.bf16.msra.mxu0 0
  %1686 = vmatprep.subr.bf16.mxu0 0
  %1687 = vmatpush2.bf16.msra.mxu0 0
  %1688 = vmatprep.subr.bf16.mxu0 0
  %1689 = vmatpush2.bf16.msra.mxu0 0
  %1690 = vmatprep.subr.bf16.mxu0 0
  %1691 = vmatpush2.bf16.msra.mxu0 0
  %1692 = vmatprep.subr.bf16.mxu0 0
  %1693 = vmatpush2.bf16.msra.mxu0 0
  %1694 = vmatprep.subr.bf16.mxu0 0
  %1695 = vmatpush2.bf16.msra.mxu0 0
  %1696 = vmatprep.subr.bf16.mxu0 0
  %1697 = vmatpush2.bf16.msra.mxu0 0
  %1698 = vmatprep.subr.bf16.mxu0 0
  %1699 = vmatpush2.bf16.msra.mxu0 0
  %1700 = vmatprep.mubr.bf16.mxu0 0
  %1701 = vmatmul.mubr.bf16.gmra.mxu0 %v994
  %v1702 = vpop.f32.mrf.mxu0
  %v1703 = vadd.f32 0.0, %v1702
  %v1704 = vpop.f32.mrf.mxu0
  %v1705 = vpop.f32.mrf.mxu0
  %v1706 = vadd.f32 0.0, %v1705
  %v1707 = vpop.f32.mrf.mxu0
  %1708 = vdwg.mxu0
  %v1709 = vpack.c.bf16 %v1706, %v1703
  %s1710 = scalar_lea.vmem %s9, 384
  %v1711 = vld [vmem:[%s1710] sm:$0xf]
  %v1712 = vld [vmem:[%s1710 + $0x4] sm:$0xf]
  %v1713 = vld [vmem:[%s1710 + $0x8] sm:$0xf]
  %v1714 = vld [vmem:[%s1710 + $0xc] sm:$0xf]
  %v1715 = vld [vmem:[%s1710 + $0x10] sm:$0xf]
  %v1716 = vld [vmem:[%s1710 + $0x14] sm:$0xf]
  %v1717 = vld [vmem:[%s1710 + $0x18] sm:$0xf]
  %v1718 = vld [vmem:[%s1710 + $0x1c] sm:$0xf]
  %v1719 = vld [vmem:[%s1710 + $0x20] sm:$0xf]
  %v1720 = vld [vmem:[%s1710 + $0x24] sm:$0xf]
  %v1721 = vld [vmem:[%s1710 + $0x28] sm:$0xf]
  %v1722 = vld [vmem:[%s1710 + $0x2c] sm:$0xf]
  %v1723 = vld [vmem:[%s1710 + $0x30] sm:$0xf]
  %v1724 = vld [vmem:[%s1710 + $0x34] sm:$0xf]
  %v1725 = vld [vmem:[%s1710 + $0x38] sm:$0xf]
  %v1726 = vld [vmem:[%s1710 + $0x3c] sm:$0xf]
  %v1727 = vlaneseq
  %v1728 = vshrl.u32 %v1727, 7
  %v1729 = vsub.s32 7, %v1728
  %v1730 = vrot.slane %v58, %v1729
  %v1747 = vunpack.c.l.b16 %v1711
  %v1748 = vunpack.c.l.b16 %v1712
  %v1749 = vunpack.c.l.b16 %v1713
  %v1750 = vunpack.c.l.b16 %v1714
  %v1751 = vunpack.c.l.b16 %v1715
  %v1752 = vunpack.c.l.b16 %v1716
  %v1753 = vunpack.c.l.b16 %v1717
  %v1754 = vunpack.c.l.b16 %v1718
  %v1755 = vunpack.c.l.b16 %v1719
  %v1756 = vunpack.c.l.b16 %v1720
  %v1757 = vunpack.c.l.b16 %v1721
  %v1758 = vunpack.c.l.b16 %v1722
  %v1759 = vunpack.c.l.b16 %v1723
  %v1760 = vunpack.c.l.b16 %v1724
  %v1761 = vunpack.c.l.b16 %v1725
  %v1762 = vunpack.c.l.b16 %v1726
  %v1763 = vpack.c.b16 %v1748, %v1747
  %v1764 = vpack.c.b16 %v1750, %v1749
  %v1765 = vpack.c.b16 %v1752, %v1751
  %v1766 = vpack.c.b16 %v1754, %v1753
  %v1767 = vpack.c.b16 %v1756, %v1755
  %v1768 = vpack.c.b16 %v1758, %v1757
  %v1769 = vpack.c.b16 %v1760, %v1759
  %v1770 = vpack.c.b16 %v1762, %v1761
  %1779 = vmatprep.subr.bf16.mxu0 0
  %1780 = vmatpush1.bf16.msra.mxu0 %v1770
  %1781 = vmatprep.subr.bf16.mxu0 0
  %1782 = vmatpush1.bf16.msra.mxu0 %v1769
  %1783 = vmatprep.subr.bf16.mxu0 0
  %1784 = vmatpush1.bf16.msra.mxu0 %v1768
  %1785 = vmatprep.subr.bf16.mxu0 0
  %1786 = vmatpush1.bf16.msra.mxu0 %v1767
  %1787 = vmatprep.subr.bf16.mxu0 0
  %1788 = vmatpush1.bf16.msra.mxu0 %v1766
  %1789 = vmatprep.subr.bf16.mxu0 0
  %1790 = vmatpush1.bf16.msra.mxu0 %v1765
  %1791 = vmatprep.subr.bf16.mxu0 0
  %1792 = vmatpush1.bf16.msra.mxu0 %v1764
  %1793 = vmatprep.subr.bf16.mxu0 0
  %1794 = vmatpush1.bf16.msra.mxu0 %v1763
  %1795 = vmatprep.subr.bf16.mxu0 0
  %1796 = vmatpush2.bf16.msra.mxu0 0
  %1797 = vmatprep.subr.bf16.mxu0 0
  %1798 = vmatpush2.bf16.msra.mxu0 0
  %1799 = vmatprep.subr.bf16.mxu0 0
  %1800 = vmatpush2.bf16.msra.mxu0 0
  %1801 = vmatprep.subr.bf16.mxu0 0
  %1802 = vmatpush2.bf16.msra.mxu0 0
  %1803 = vmatprep.subr.bf16.mxu0 0
  %1804 = vmatpush2.bf16.msra.mxu0 0
  %1805 = vmatprep.subr.bf16.mxu0 0
  %1806 = vmatpush2.bf16.msra.mxu0 0
  %1807 = vmatprep.subr.bf16.mxu0 0
  %1808 = vmatpush2.bf16.msra.mxu0 0
  %1809 = vmatprep.subr.bf16.mxu0 0
  %1810 = vmatpush2.bf16.msra.mxu0 0
  %1811 = vmatprep.mubr.bf16.mxu0 0
  %1812 = vmatmul.mubr.bf16.gmra.mxu0 %v1709
  %v1813 = vpop.f32.mrf.mxu0
  %v1814 = vadd.f32 %v1730, %v1813
  %v1815 = vpop.f32.mrf.mxu0
  %v1816 = vpop.f32.mrf.mxu0
  %v1817 = vadd.f32 %v1730, %v1816
  %v1818 = vpop.f32.mrf.mxu0
  %1819 = vdwg.mxu0
  %v1820 = vmax.f32 %v1814, 0.0
  %v1821 = vmax.f32 %v1817, 0.0
  %v1822 = vand.u32 2147483647, %v1814
  %v1823 = vand.u32 2147483647, %v1817
  %v1824 = vsub.f32 0.0, %v1822
  %v1825 = vsub.f32 0.0, %v1823
  %v1826 = vmul.f32 %v1824, 1.442695
  %v1827 = vpow.pop %v1826
  %v1828 = vmul.f32 %v1825, 1.442695
  %v1829 = vpow.pop %v1828
  %v1830 = vadd.f32 %v1827, 1.0
  %v1831 = vlog2.pop %v1830
  %v1832 = vmul.f32 %v1831, 0.6931472
  %v1833 = vmul.f32 -0.5, %v1827
  %v1834 = vadd.f32 %v1833, 1.0
  %v1835 = vmul.f32 %v1834, %v1827
  %v1836 = vand.u32 2147483647, %v1827
  %vm1837 = vcmp.lt.f32.partialorder %v1836, 0.0004427343
  %v1838 = vsel %vm1837, %v1835, %v1832
  %v1839 = vadd.f32 %v1829, 1.0
  %v1840 = vlog2.pop %v1839
  %v1841 = vmul.f32 %v1840, 0.6931472
  %v1842 = vmul.f32 -0.5, %v1829
  %v1843 = vadd.f32 %v1842, 1.0
  %v1844 = vmul.f32 %v1843, %v1829
  %v1845 = vand.u32 2147483647, %v1829
  %vm1846 = vcmp.lt.f32.partialorder %v1845, 0.0004427343
  %v1847 = vsel %vm1846, %v1844, %v1841
  %v1848 = vadd.f32 %v1820, %v1838
  %v1849 = vadd.f32 %v1821, %v1847
  %v1850 = vsub.f32 %v1848, 0.6931472
  %v1851 = vsub.f32 %v1849, 0.6931472
  %v1852 = vpack.c.bf16 %v1851, %v1850
  %s1853 = scalar_lea.vmem %s9, 448
  %v1854 = vld [vmem:[%s1853] sm:$0xf]
  %v1855 = vld [vmem:[%s1853 + $0x4] sm:$0xf]
  %v1856 = vld [vmem:[%s1853 + $0x8] sm:$0xf]
  %v1857 = vld [vmem:[%s1853 + $0xc] sm:$0xf]
  %v1858 = vld [vmem:[%s1853 + $0x10] sm:$0xf]
  %v1859 = vld [vmem:[%s1853 + $0x14] sm:$0xf]
  %v1860 = vld [vmem:[%s1853 + $0x18] sm:$0xf]
  %v1861 = vld [vmem:[%s1853 + $0x1c] sm:$0xf]
  %v1862 = vld [vmem:[%s1853 + $0x20] sm:$0xf]
  %v1863 = vld [vmem:[%s1853 + $0x24] sm:$0xf]
  %v1864 = vld [vmem:[%s1853 + $0x28] sm:$0xf]
  %v1865 = vld [vmem:[%s1853 + $0x2c] sm:$0xf]
  %v1866 = vld [vmem:[%s1853 + $0x30] sm:$0xf]
  %v1867 = vld [vmem:[%s1853 + $0x34] sm:$0xf]
  %v1868 = vld [vmem:[%s1853 + $0x38] sm:$0xf]
  %v1869 = vld [vmem:[%s1853 + $0x3c] sm:$0xf]
  %v1886 = vunpack.c.l.b16 %v1854
  %v1887 = vunpack.c.l.b16 %v1855
  %v1888 = vunpack.c.l.b16 %v1856
  %v1889 = vunpack.c.l.b16 %v1857
  %v1890 = vunpack.c.l.b16 %v1858
  %v1891 = vunpack.c.l.b16 %v1859
  %v1892 = vunpack.c.l.b16 %v1860
  %v1893 = vunpack.c.l.b16 %v1861
  %v1894 = vunpack.c.l.b16 %v1862
  %v1895 = vunpack.c.l.b16 %v1863
  %v1896 = vunpack.c.l.b16 %v1864
  %v1897 = vunpack.c.l.b16 %v1865
  %v1898 = vunpack.c.l.b16 %v1866
  %v1899 = vunpack.c.l.b16 %v1867
  %v1900 = vunpack.c.l.b16 %v1868
  %v1901 = vunpack.c.l.b16 %v1869
  %v1902 = vpack.c.b16 %v1887, %v1886
  %v1903 = vpack.c.b16 %v1889, %v1888
  %v1904 = vpack.c.b16 %v1891, %v1890
  %v1905 = vpack.c.b16 %v1893, %v1892
  %v1906 = vpack.c.b16 %v1895, %v1894
  %v1907 = vpack.c.b16 %v1897, %v1896
  %v1908 = vpack.c.b16 %v1899, %v1898
  %v1909 = vpack.c.b16 %v1901, %v1900
  %1918 = vmatprep.subr.bf16.mxu0 0
  %1919 = vmatpush1.bf16.msra.mxu0 %v1909
  %1920 = vmatprep.subr.bf16.mxu0 0
  %1921 = vmatpush1.bf16.msra.mxu0 %v1908
  %1922 = vmatprep.subr.bf16.mxu0 0
  %1923 = vmatpush1.bf16.msra.mxu0 %v1907
  %1924 = vmatprep.subr.bf16.mxu0 0
  %1925 = vmatpush1.bf16.msra.mxu0 %v1906
  %1926 = vmatprep.subr.bf16.mxu0 0
  %1927 = vmatpush1.bf16.msra.mxu0 %v1905
  %1928 = vmatprep.subr.bf16.mxu0 0
  %1929 = vmatpush1.bf16.msra.mxu0 %v1904
  %1930 = vmatprep.subr.bf16.mxu0 0
  %1931 = vmatpush1.bf16.msra.mxu0 %v1903
  %1932 = vmatprep.subr.bf16.mxu0 0
  %1933 = vmatpush1.bf16.msra.mxu0 %v1902
  %1934 = vmatprep.subr.bf16.mxu0 0
  %1935 = vmatpush2.bf16.msra.mxu0 0
  %1936 = vmatprep.subr.bf16.mxu0 0
  %1937 = vmatpush2.bf16.msra.mxu0 0
  %1938 = vmatprep.subr.bf16.mxu0 0
  %1939 = vmatpush2.bf16.msra.mxu0 0
  %1940 = vmatprep.subr.bf16.mxu0 0
  %1941 = vmatpush2.bf16.msra.mxu0 0
  %1942 = vmatprep.subr.bf16.mxu0 0
  %1943 = vmatpush2.bf16.msra.mxu0 0
  %1944 = vmatprep.subr.bf16.mxu0 0
  %1945 = vmatpush2.bf16.msra.mxu0 0
  %1946 = vmatprep.subr.bf16.mxu0 0
  %1947 = vmatpush2.bf16.msra.mxu0 0
  %1948 = vmatprep.subr.bf16.mxu0 0
  %1949 = vmatpush2.bf16.msra.mxu0 0
  %1950 = vmatprep.mubr.bf16.mxu0 0
  %1951 = vmatmul.mubr.bf16.gmra.mxu0 %v1852
  %v1952 = vpop.f32.mrf.mxu0
  %v1953 = vadd.f32 0.0, %v1952
  %v1954 = vpop.f32.mrf.mxu0
  %v1955 = vpop.f32.mrf.mxu0
  %v1956 = vadd.f32 0.0, %v1955
  %v1957 = vpop.f32.mrf.mxu0
  %1958 = vdwg.mxu0
  %v1959 = vadd.f32 %v1293, %v1953
  %v1960 = vadd.f32 %v1294, %v1956
  %v1961 = vlaneseq
  %v1962 = vshrl.u32 %v1961, 7
  %v1963 = vsub.s32 0, %v1962
  %v1964 = vrot.slane %v59, %v1963
  %v1965 = vadd.f32 %v1959, %v1964
  %v1966 = vadd.f32 %v1960, %v1964
  %v1967 = vpack.c.bf16 %v1966, %v1965
  %s1968 = scalar_lea.vmem %s9, 512
  %v1969 = vld [vmem:[%s1968] sm:$0xf]
  %v1970 = vld [vmem:[%s1968 + $0x4] sm:$0xf]
  %v1971 = vld [vmem:[%s1968 + $0x8] sm:$0xf]
  %v1972 = vld [vmem:[%s1968 + $0xc] sm:$0xf]
  %v1973 = vld [vmem:[%s1968 + $0x10] sm:$0xf]
  %v1974 = vld [vmem:[%s1968 + $0x14] sm:$0xf]
  %v1975 = vld [vmem:[%s1968 + $0x18] sm:$0xf]
  %v1976 = vld [vmem:[%s1968 + $0x1c] sm:$0xf]
  %v1977 = vld [vmem:[%s1968 + $0x20] sm:$0xf]
  %v1978 = vld [vmem:[%s1968 + $0x24] sm:$0xf]
  %v1979 = vld [vmem:[%s1968 + $0x28] sm:$0xf]
  %v1980 = vld [vmem:[%s1968 + $0x2c] sm:$0xf]
  %v1981 = vld [vmem:[%s1968 + $0x30] sm:$0xf]
  %v1982 = vld [vmem:[%s1968 + $0x34] sm:$0xf]
  %v1983 = vld [vmem:[%s1968 + $0x38] sm:$0xf]
  %v1984 = vld [vmem:[%s1968 + $0x3c] sm:$0xf]
  %v1985 = vlaneseq
  %v1986 = vshrl.u32 %v1985, 7
  %v1987 = vsub.s32 1, %v1986
  %v1988 = vrot.slane %v59, %v1987
  %v2005 = vunpack.c.l.b16 %v1969
  %v2006 = vunpack.c.l.b16 %v1970
  %v2007 = vunpack.c.l.b16 %v1971
  %v2008 = vunpack.c.l.b16 %v1972
  %v2009 = vunpack.c.l.b16 %v1973
  %v2010 = vunpack.c.l.b16 %v1974
  %v2011 = vunpack.c.l.b16 %v1975
  %v2012 = vunpack.c.l.b16 %v1976
  %v2013 = vunpack.c.l.b16 %v1977
  %v2014 = vunpack.c.l.b16 %v1978
  %v2015 = vunpack.c.l.b16 %v1979
  %v2016 = vunpack.c.l.b16 %v1980
  %v2017 = vunpack.c.l.b16 %v1981
  %v2018 = vunpack.c.l.b16 %v1982
  %v2019 = vunpack.c.l.b16 %v1983
  %v2020 = vunpack.c.l.b16 %v1984
  %v2021 = vpack.c.b16 %v2006, %v2005
  %v2022 = vpack.c.b16 %v2008, %v2007
  %v2023 = vpack.c.b16 %v2010, %v2009
  %v2024 = vpack.c.b16 %v2012, %v2011
  %v2025 = vpack.c.b16 %v2014, %v2013
  %v2026 = vpack.c.b16 %v2016, %v2015
  %v2027 = vpack.c.b16 %v2018, %v2017
  %v2028 = vpack.c.b16 %v2020, %v2019
  %2037 = vmatprep.subr.bf16.mxu0 0
  %2038 = vmatpush1.bf16.msra.mxu0 %v2028
  %2039 = vmatprep.subr.bf16.mxu0 0
  %2040 = vmatpush1.bf16.msra.mxu0 %v2027
  %2041 = vmatprep.subr.bf16.mxu0 0
  %2042 = vmatpush1.bf16.msra.mxu0 %v2026
  %2043 = vmatprep.subr.bf16.mxu0 0
  %2044 = vmatpush1.bf16.msra.mxu0 %v2025
  %2045 = vmatprep.subr.bf16.mxu0 0
  %2046 = vmatpush1.bf16.msra.mxu0 %v2024
  %2047 = vmatprep.subr.bf16.mxu0 0
  %2048 = vmatpush1.bf16.msra.mxu0 %v2023
  %2049 = vmatprep.subr.bf16.mxu0 0
  %2050 = vmatpush1.bf16.msra.mxu0 %v2022
  %2051 = vmatprep.subr.bf16.mxu0 0
  %2052 = vmatpush1.bf16.msra.mxu0 %v2021
  %2053 = vmatprep.subr.bf16.mxu0 0
  %2054 = vmatpush2.bf16.msra.mxu0 0
  %2055 = vmatprep.subr.bf16.mxu0 0
  %2056 = vmatpush2.bf16.msra.mxu0 0
  %2057 = vmatprep.subr.bf16.mxu0 0
  %2058 = vmatpush2.bf16.msra.mxu0 0
  %2059 = vmatprep.subr.bf16.mxu0 0
  %2060 = vmatpush2.bf16.msra.mxu0 0
  %2061 = vmatprep.subr.bf16.mxu0 0
  %2062 = vmatpush2.bf16.msra.mxu0 0
  %2063 = vmatprep.subr.bf16.mxu0 0
  %2064 = vmatpush2.bf16.msra.mxu0 0
  %2065 = vmatprep.subr.bf16.mxu0 0
  %2066 = vmatpush2.bf16.msra.mxu0 0
  %2067 = vmatprep.subr.bf16.mxu0 0
  %2068 = vmatpush2.bf16.msra.mxu0 0
  %2069 = vmatprep.mubr.bf16.mxu0 0
  %2070 = vmatmul.mubr.bf16.gmra.mxu0 %v1967
  %v2071 = vpop.f32.mrf.mxu0
  %v2072 = vadd.f32 %v1988, %v2071
  %v2073 = vpop.f32.mrf.mxu0
  %v2074 = vpop.f32.mrf.mxu0
  %v2075 = vadd.f32 %v1988, %v2074
  %v2076 = vpop.f32.mrf.mxu0
  %2077 = vdwg.mxu0
  %v2078 = vmax.f32 %v2072, 0.0
  %v2079 = vmax.f32 %v2075, 0.0
  %v2080 = vand.u32 2147483647, %v2072
  %v2081 = vand.u32 2147483647, %v2075
  %v2082 = vsub.f32 0.0, %v2080
  %v2083 = vsub.f32 0.0, %v2081
  %v2084 = vmul.f32 %v2082, 1.442695
  %v2085 = vpow.pop %v2084
  %v2086 = vmul.f32 %v2083, 1.442695
  %v2087 = vpow.pop %v2086
  %v2088 = vadd.f32 %v2085, 1.0
  %v2089 = vlog2.pop %v2088
  %v2090 = vmul.f32 %v2089, 0.6931472
  %v2091 = vmul.f32 -0.5, %v2085
  %v2092 = vadd.f32 %v2091, 1.0
  %v2093 = vmul.f32 %v2092, %v2085
  %v2094 = vand.u32 2147483647, %v2085
  %vm2095 = vcmp.lt.f32.partialorder %v2094, 0.0004427343
  %v2096 = vsel %vm2095, %v2093, %v2090
  %v2097 = vadd.f32 %v2087, 1.0
  %v2098 = vlog2.pop %v2097
  %v2099 = vmul.f32 %v2098, 0.6931472
  %v2100 = vmul.f32 -0.5, %v2087
  %v2101 = vadd.f32 %v2100, 1.0
  %v2102 = vmul.f32 %v2101, %v2087
  %v2103 = vand.u32 2147483647, %v2087
  %vm2104 = vcmp.lt.f32.partialorder %v2103, 0.0004427343
  %v2105 = vsel %vm2104, %v2102, %v2099
  %v2106 = vadd.f32 %v2078, %v2096
  %v2107 = vadd.f32 %v2079, %v2105
  %v2108 = vsub.f32 %v2106, 0.6931472
  %v2109 = vsub.f32 %v2107, 0.6931472
  %v2110 = vpack.c.bf16 %v2109, %v2108
  %s2111 = scalar_lea.vmem %s9, 576
  %v2112 = vld [vmem:[%s2111] sm:$0xf]
  %v2113 = vld [vmem:[%s2111 + $0x4] sm:$0xf]
  %v2114 = vld [vmem:[%s2111 + $0x8] sm:$0xf]
  %v2115 = vld [vmem:[%s2111 + $0xc] sm:$0xf]
  %v2116 = vld [vmem:[%s2111 + $0x10] sm:$0xf]
  %v2117 = vld [vmem:[%s2111 + $0x14] sm:$0xf]
  %v2118 = vld [vmem:[%s2111 + $0x18] sm:$0xf]
  %v2119 = vld [vmem:[%s2111 + $0x1c] sm:$0xf]
  %v2120 = vld [vmem:[%s2111 + $0x20] sm:$0xf]
  %v2121 = vld [vmem:[%s2111 + $0x24] sm:$0xf]
  %v2122 = vld [vmem:[%s2111 + $0x28] sm:$0xf]
  %v2123 = vld [vmem:[%s2111 + $0x2c] sm:$0xf]
  %v2124 = vld [vmem:[%s2111 + $0x30] sm:$0xf]
  %v2125 = vld [vmem:[%s2111 + $0x34] sm:$0xf]
  %v2126 = vld [vmem:[%s2111 + $0x38] sm:$0xf]
  %v2127 = vld [vmem:[%s2111 + $0x3c] sm:$0xf]
  %v2128 = vlaneseq
  %v2129 = vshrl.u32 %v2128, 7
  %v2130 = vsub.s32 2, %v2129
  %v2131 = vrot.slane %v59, %v2130
  %v2148 = vunpack.c.l.b16 %v2112
  %v2149 = vunpack.c.l.b16 %v2113
  %v2150 = vunpack.c.l.b16 %v2114
  %v2151 = vunpack.c.l.b16 %v2115
  %v2152 = vunpack.c.l.b16 %v2116
  %v2153 = vunpack.c.l.b16 %v2117
  %v2154 = vunpack.c.l.b16 %v2118
  %v2155 = vunpack.c.l.b16 %v2119
  %v2156 = vunpack.c.l.b16 %v2120
  %v2157 = vunpack.c.l.b16 %v2121
  %v2158 = vunpack.c.l.b16 %v2122
  %v2159 = vunpack.c.l.b16 %v2123
  %v2160 = vunpack.c.l.b16 %v2124
  %v2161 = vunpack.c.l.b16 %v2125
  %v2162 = vunpack.c.l.b16 %v2126
  %v2163 = vunpack.c.l.b16 %v2127
  %v2164 = vpack.c.b16 %v2149, %v2148
  %v2165 = vpack.c.b16 %v2151, %v2150
  %v2166 = vpack.c.b16 %v2153, %v2152
  %v2167 = vpack.c.b16 %v2155, %v2154
  %v2168 = vpack.c.b16 %v2157, %v2156
  %v2169 = vpack.c.b16 %v2159, %v2158
  %v2170 = vpack.c.b16 %v2161, %v2160
  %v2171 = vpack.c.b16 %v2163, %v2162
  %2180 = vmatprep.subr.bf16.mxu0 0
  %2181 = vmatpush1.bf16.msra.mxu0 %v2171
  %2182 = vmatprep.subr.bf16.mxu0 0
  %2183 = vmatpush1.bf16.msra.mxu0 %v2170
  %2184 = vmatprep.subr.bf16.mxu0 0
  %2185 = vmatpush1.bf16.msra.mxu0 %v2169
  %2186 = vmatprep.subr.bf16.mxu0 0
  %2187 = vmatpush1.bf16.msra.mxu0 %v2168
  %2188 = vmatprep.subr.bf16.mxu0 0
  %2189 = vmatpush1.bf16.msra.mxu0 %v2167
  %2190 = vmatprep.subr.bf16.mxu0 0
  %2191 = vmatpush1.bf16.msra.mxu0 %v2166
  %2192 = vmatprep.subr.bf16.mxu0 0
  %2193 = vmatpush1.bf16.msra.mxu0 %v2165
  %2194 = vmatprep.subr.bf16.mxu0 0
  %2195 = vmatpush1.bf16.msra.mxu0 %v2164
  %2196 = vmatprep.subr.bf16.mxu0 0
  %2197 = vmatpush2.bf16.msra.mxu0 0
  %2198 = vmatprep.subr.bf16.mxu0 0
  %2199 = vmatpush2.bf16.msra.mxu0 0
  %2200 = vmatprep.subr.bf16.mxu0 0
  %2201 = vmatpush2.bf16.msra.mxu0 0
  %2202 = vmatprep.subr.bf16.mxu0 0
  %2203 = vmatpush2.bf16.msra.mxu0 0
  %2204 = vmatprep.subr.bf16.mxu0 0
  %2205 = vmatpush2.bf16.msra.mxu0 0
  %2206 = vmatprep.subr.bf16.mxu0 0
  %2207 = vmatpush2.bf16.msra.mxu0 0
  %2208 = vmatprep.subr.bf16.mxu0 0
  %2209 = vmatpush2.bf16.msra.mxu0 0
  %2210 = vmatprep.subr.bf16.mxu0 0
  %2211 = vmatpush2.bf16.msra.mxu0 0
  %2212 = vmatprep.mubr.bf16.mxu0 0
  %2213 = vmatmul.mubr.bf16.gmra.mxu0 %v2110
  %v2214 = vpop.f32.mrf.mxu0
  %v2215 = vadd.f32 %v2131, %v2214
  %v2216 = vpop.f32.mrf.mxu0
  %v2217 = vpop.f32.mrf.mxu0
  %v2218 = vadd.f32 %v2131, %v2217
  %v2219 = vpop.f32.mrf.mxu0
  %2220 = vdwg.mxu0
  %v2221 = vld [vmem:[%s5] sm:$0xf]
  %v2222 = vpack.c.bf16 %v2218, %v2215
  %v2224 = vsel %vm844, %v2221, 0
  %2226 = vmatprep.subr.bf16.mxu0 0
  %2227 = vmatpush1.bf16.msra.mxu0 0
  %2228 = vmatprep.subr.bf16.mxu0 0
  %2229 = vmatpush1.bf16.msra.mxu0 0
  %2230 = vmatprep.subr.bf16.mxu0 0
  %2231 = vmatpush1.bf16.msra.mxu0 0
  %2232 = vmatprep.subr.bf16.mxu0 0
  %2233 = vmatpush1.bf16.msra.mxu0 0
  %2234 = vmatprep.subr.bf16.mxu0 0
  %2235 = vmatpush1.bf16.msra.mxu0 0
  %2236 = vmatprep.subr.bf16.mxu0 0
  %2237 = vmatpush1.bf16.msra.mxu0 0
  %2238 = vmatprep.subr.bf16.mxu0 0
  %2239 = vmatpush1.bf16.msra.mxu0 0
  %2240 = vmatprep.subr.bf16.mxu0 0
  %2241 = vmatpush1.bf16.msra.mxu0 %v2222
  %2242 = vmatprep.subr.bf16.mxu0 0
  %2243 = vmatpush2.bf16.msra.mxu0 0
  %2244 = vmatprep.subr.bf16.mxu0 0
  %2245 = vmatpush2.bf16.msra.mxu0 0
  %2246 = vmatprep.subr.bf16.mxu0 0
  %2247 = vmatpush2.bf16.msra.mxu0 0
  %2248 = vmatprep.subr.bf16.mxu0 0
  %2249 = vmatpush2.bf16.msra.mxu0 0
  %2250 = vmatprep.subr.bf16.mxu0 0
  %2251 = vmatpush2.bf16.msra.mxu0 0
  %2252 = vmatprep.subr.bf16.mxu0 0
  %2253 = vmatpush2.bf16.msra.mxu0 0
  %2254 = vmatprep.subr.bf16.mxu0 0
  %2255 = vmatpush2.bf16.msra.mxu0 0
  %2256 = vmatprep.subr.bf16.mxu0 0
  %2257 = vmatpush2.bf16.msra.mxu0 0
  %2258 = vmatprep.mubr.bf16.mxu0 0
  %2259 = vmatmul.mubr.bf16.gmra.mxu0 %v2224
  %v2260 = vpop.f32.mrf.mxu0
  %v2261 = vadd.f32 0.0, %v2260
  %v2262 = vpop.f32.mrf.mxu0
  %v2263 = vpop.f32.mrf.mxu0
  %v2264 = vpop.f32.mrf.mxu0
  %2265 = vdwg.mxu0
  %2266 = vst [vmem:[%s10] sm:$0xff] %v2261
  // Predicated region
  $region42: #{_lambda_.1} parent=0 // pred_check
    _
  $region43: #{_lambda_.1} parent=0 // pred_check_branch
    %2268 = sbr.rel (0) target = $region45
  $region44: #{_lambda_.1} parent=0 // pred_region
    _
  $region45: #{_lambda_.1} parent=0 // pred_fallthru
    _
  // Predicated region
  $region46: #{_lambda_.1} parent=0 // pred_check
    _
  $region47: #{_lambda_.1} parent=0 // pred_check_branch
    %2270 = sbr.rel (0) target = $region49
  $region48: #{_lambda_.1} parent=0 // pred_region
    _
  $region49: #{_lambda_.1} parent=0 // pred_fallthru
    _

</llo_original>
